<compile_context>
chip_gen: v6e
topology: v6e:2x2x1
jax: 0.10.0
libtpu: 0.0.40
codegen_flags: <defaults>
</compile_context>

<pallas_src>
import functools
import math

import jax
import jax.numpy as jnp
from jax.experimental import pallas as pl
from jax.experimental.pallas import tpu as pltpu

LN_EPS = 1e-5
DEFAULT_COMPUTE_DTYPE = jnp.bfloat16   # MXU operand dtype (f32 accumulation everywhere)


def _round_up(x, m):
    return ((x + m - 1) // m) * m


@functools.lru_cache(maxsize=1)
def _tpu_config():
    """Return (default_block_m, vmem_limit_bytes) for the attached TPU generation."""
    kind = ""
    try:
        kind = jax.devices()[0].device_kind.lower()
    except Exception:
        pass
    vmem_phys = None
    try:
        vmem_phys = int(pltpu.get_tpu_info().vmem_capacity_bytes)
    except Exception:
        pass
    is_v7 = ("v7" in kind) or ("7x" in kind) or (
        vmem_phys is not None and vmem_phys <= 64 * 1024 * 1024)
    if is_v7:
        vmem_limit = 40 * 1024 * 1024        # 64 MiB/TC physical -> leave Mosaic headroom
        block_m = 512                        # ~310 FLOP/B roofline -> tm ~ 384-512
    else:
        vmem_limit = 96 * 1024 * 1024        # 128 MiB parts (v5e / v6e)
        if ("v5e" in kind) or ("v5 lite" in kind) or ("v5lite" in kind):
            block_m = 256                    # v5e already compute-bound at tm ~ 256
        else:
            block_m = 1024                   # v6e needs ~650-700 FLOP/B -> tm ~ 768-1024
    return block_m, vmem_limit


def _gelu_exact(x):
    # Matches torch.nn.GELU() default (exact erf formulation), computed in f32.
    # TODO(synk): on v5e jax.nn.gelu(approximate=True) moves this onto the EUP (tanh)
    # and is cheaper, if the tolerance budget vs. the torch reference allows.
    return 0.5 * x * (1.0 + jax.lax.erf(x * 0.7071067811865476))


def _layernorm_f32(x, gamma, beta):
    # nn.LayerNorm(dim) with eps=1e-5 (biased variance), computed in f32.
    x32 = x.astype(jnp.float32)
    mean = jnp.mean(x32, axis=-1, keepdims=True)
    var = jnp.mean(jnp.square(x32 - mean), axis=-1, keepdims=True)
    xn = (x32 - mean) * jax.lax.rsqrt(var + LN_EPS)
    return xn * gamma.astype(jnp.float32) + beta.astype(jnp.float32)


# ----------------------------------------------------------------------------
# PreNorm + FeedForward + residual
# ----------------------------------------------------------------------------
def prenorm_ffn_kernel(x_ref, g_ref, b_ref, w1_ref, b1_ref, w2_ref, b2_ref,
                       o_ref, ln_scr, acc_scr):
    # x_ref : (TM, D)          g_ref/b_ref : (1, D) f32
    # w1_ref: (D, TH) bf16     b1_ref      : (1, TH) f32
    # w2_ref: (TH, D) bf16     b2_ref      : (1, D) f32
    # o_ref : (TM, D)          ln_scr (TM, D) bf16 / acc_scr (TM, D) f32
    h_idx = pl.program_id(1)

    @pl.when(h_idx == 0)
    def _():
        # LayerNorm once per token tile, cast once into matmul dtype.
        ln_scr[...] = _layernorm_f32(x_ref[...], g_ref[...], b_ref[...]).astype(ln_scr.dtype)
        acc_scr[...] = jnp.zeros_like(acc_scr)

    h = jnp.dot(ln_scr[...], w1_ref[...], preferred_element_type=jnp.float32)
    h = _gelu_exact(h + b1_ref[...].astype(jnp.float32))
    acc_scr[...] += jnp.dot(h.astype(w2_ref.dtype), w2_ref[...],
                            preferred_element_type=jnp.float32)

    @pl.when(h_idx == pl.num_programs(1) - 1)
    def _():
        y = acc_scr[...] + b2_ref[...].astype(jnp.float32) + x_ref[...].astype(jnp.float32)
        o_ref[...] = y.astype(o_ref.dtype)


def prenorm_feed_forward(x, gamma, beta, w1, b1, w2, b2, *,
                         compute_dtype=DEFAULT_COMPUTE_DTYPE, block_m=None):
    """x: (..., dim). Returns FeedForward(LayerNorm(x)) + x."""
    orig_shape = x.shape
    dim = orig_shape[-1]
    hidden = w1.shape[1]
    x2d = x.reshape(-1, dim)
    m = x2d.shape[0]

    cfg_block_m, vmem_limit = _tpu_config()
    if block_m is None:
        block_m = cfg_block_m

    csize = jnp.dtype(compute_dtype).itemsize
    xsz = x2d.dtype.itemsize

    # Hidden tiling: keep full w1/w2 resident (constant index_map -> fetched once)
    # whenever they fit the budget; otherwise tile and zero-pad hidden to a multiple.
    weight_budget = min(vmem_limit // 3, 24 * 1024 * 1024)
    if 2 * dim * hidden * csize <= weight_budget:
        th = hidden
        hidden_pad = hidden
    else:
        th = 512 if hidden >= 512 else (256 if hidden >= 256 else 128)
        hidden_pad = _round_up(hidden, th)

    w1c = w1.astype(compute_dtype)
    w2c = w2.astype(compute_dtype)
    b1f = b1.astype(jnp.float32)
    if hidden_pad != hidden:
        # Zero-padded hidden units contribute exactly 0 (0 preact -> gelu(0)=0 -> 0 rows).
        w1c = jnp.pad(w1c, ((0, 0), (0, hidden_pad - hidden)))
        b1f = jnp.pad(b1f, ((0, 0), (0, hidden_pad - hidden)))
        w2c = jnp.pad(w2c, ((0, hidden_pad - hidden), (0, 0)))

    # Token tile: multiple of 8 sublanes; shrink if the VMEM estimate does not fit.
    def vmem_est(tm_):
        return (2 * 2 * tm_ * dim * xsz                 # x + out blocks, double-buffered
                + tm_ * dim * (csize + 4)               # ln scratch + f32 accumulator
                + 2 * tm_ * th * 4                      # (tm, th) f32 intermediates
                + 2 * 2 * (dim * th + th * dim) * csize)  # w1/w2 blocks, double-buffered

    tm = min(block_m, _round_up(m, 8))
    while tm > 8 and vmem_est(tm) > int(vmem_limit * 0.85):
        tm = max(8, _round_up(tm // 2, 8))

    m_pad = _round_up(m, tm)
    if m_pad != m:
        x2d = jnp.pad(x2d, ((0, m_pad - m), (0, 0)))

    grid = (m_pad // tm, hidden_pad // th)

    out = pl.pallas_call(
        prenorm_ffn_kernel,
        out_shape=jax.ShapeDtypeStruct((m_pad, dim), x.dtype),
        grid_spec=pltpu.PrefetchScalarGridSpec(
            num_scalar_prefetch=0,
            grid=grid,
            in_specs=[
                pl.BlockSpec((tm, dim), lambda i, h: (i, 0)),      # x (streamed)
                pl.BlockSpec((1, dim), lambda i, h: (0, 0)),       # ln gamma (resident)
                pl.BlockSpec((1, dim), lambda i, h: (0, 0)),       # ln beta  (resident)
                pl.BlockSpec((dim, th), lambda i, h: (0, h)),      # w1 block (resident if th==hidden)
                pl.BlockSpec((1, th), lambda i, h: (0, h)),        # b1 block
                pl.BlockSpec((th, dim), lambda i, h: (h, 0)),      # w2 block
                pl.BlockSpec((1, dim), lambda i, h: (0, 0)),       # b2 (resident)
            ],
            out_specs=pl.BlockSpec((tm, dim), lambda i, h: (i, 0)),
            scratch_shapes=[
                pltpu.VMEM((tm, dim), compute_dtype),   # layernorm(x) cache (bf16)
                pltpu.VMEM((tm, dim), jnp.float32),     # f32 accumulator
            ],
        ),
        compiler_params=pltpu.CompilerParams(
            dimension_semantics=("parallel", "arbitrary"),
            vmem_limit_bytes=vmem_limit,
        ),
    )(x2d, gamma.astype(jnp.float32), beta.astype(jnp.float32),
      w1c, b1f, w2c, b2.astype(jnp.float32))

    if m_pad != m:
        out = out[:m]
    return out.reshape(orig_shape)


# ----------------------------------------------------------------------------
# PreNorm + Attention + residual
# ----------------------------------------------------------------------------
def prenorm_attention_kernel(x_ref, g_ref, b_ref, wqkv_ref, wo_ref, bo_ref, o_ref,
                             *, heads, dim_head, scale, compute_dtype):
    # x_ref : (BT, N, D)   wqkv_ref : (D, 3*inner) bf16
    # wo_ref: (inner, D) bf16   bo_ref : (1, D) f32
    bt, n, d = x_ref.shape
    inner = heads * dim_head

    x = x_ref[...]                                            # (BT, N, D)
    x32 = x.astype(jnp.float32)
    xn = _layernorm_f32(x.reshape(bt * n, d), g_ref[...], b_ref[...])   # (BT*N, D) f32

    # QKV projection for all packed batch rows at once (fills the MXU rows).
    qkv = jnp.dot(xn.astype(compute_dtype), wqkv_ref[...],
                  preferred_element_type=jnp.float32)         # (BT*N, 3*inner) f32

    wo = wo_ref[...]                                          # (inner, D) bf16
    bo32 = bo_ref[...].astype(jnp.float32)                    # (1, D)

    for bi in range(bt):
        qkv_b = qkv[bi * n:(bi + 1) * n]                      # (N, 3*inner)
        acc = bo32 + x32[bi]                                  # bias + residual, (N, D) f32
        for h in range(heads):
            o0 = h * dim_head
            # Scale folded into q on the (N, dh) tensor (not the (N, N) scores).
            q = (qkv_b[:, o0:o0 + dim_head] * scale).astype(compute_dtype)
            k = qkv_b[:, inner + o0: inner + o0 + dim_head].astype(compute_dtype)
            v = qkv_b[:, 2 * inner + o0: 2 * inner + o0 + dim_head].astype(compute_dtype)
            # dots = q @ k^T (contract on last dims, no explicit transpose)
            dots = jax.lax.dot_general(q, k, (((1,), (1,)), ((), ())),
                                       preferred_element_type=jnp.float32)  # (N, N) f32
            mx = jnp.max(dots, axis=-1, keepdims=True)
            e = jnp.exp(dots - mx)
            p = e * pl.reciprocal(jnp.sum(e, axis=-1, keepdims=True), approx=True)
            out_h = jnp.dot(p.astype(compute_dtype), v,
                            preferred_element_type=jnp.float32)             # (N, dh)
            # Accumulate straight through the matching Wo row slab (no concat).
            acc = acc + jnp.dot(out_h.astype(compute_dtype),
                                wo[o0:o0 + dim_head, :],
                                preferred_element_type=jnp.float32)
        o_ref[bi] = acc.astype(o_ref.dtype)


def _pick_batch_tile(b, n, d, inner, x_itemsize, csize, vmem_limit):
    """Largest divisor of b whose packed block fits a rough VMEM estimate."""
    def est(bt):
        rows = bt * n
        io_blocks = 2 * 2 * bt * n * d * x_itemsize           # x + out, double-buffered
        qkv = rows * 3 * inner * 4                             # f32 qkv activations
        weights = 2 * (d * 3 * inner + inner * d) * csize      # Wqkv + Wo, double-buffered
        per_head = 2 * n * n * 4 + n * inner * 4 + n * d * 4   # scores / attn-out / acc
        return io_blocks + qkv + weights + per_head

    best = 1
    for bt in range(1, b + 1):
        if b % bt != 0:
            continue
        if bt * n > 4096:
            break
        if est(bt) <= int(vmem_limit * 0.7):
            best = bt
    return best


def prenorm_attention(x, gamma, beta, wqkv, wo, bo, *, heads, dim_head,
                      compute_dtype=DEFAULT_COMPUTE_DTYPE, batch_tile=None):
    """x: (B, N, D). Returns Attention(LayerNorm(x)) + x."""
    b, n, d = x.shape
    inner = heads * dim_head
    scale = dim_head ** (-0.5)
    _, vmem_limit = _tpu_config()
    csize = jnp.dtype(compute_dtype).itemsize

    if batch_tile is None:
        batch_tile = _pick_batch_tile(b, n, d, inner, x.dtype.itemsize, csize, vmem_limit)
    bt = batch_tile
    if b % bt != 0:
        bt = 1

    kernel = functools.partial(prenorm_attention_kernel, heads=heads,
                               dim_head=dim_head, scale=scale,
                               compute_dtype=compute_dtype)

    return pl.pallas_call(
        kernel,
        out_shape=jax.ShapeDtypeStruct((b, n, d), x.dtype),
        grid_spec=pltpu.PrefetchScalarGridSpec(
            num_scalar_prefetch=0,
            grid=(b // bt,),
            in_specs=[
                pl.BlockSpec((bt, n, d), lambda i: (i, 0, 0)),      # packed batch block
                pl.BlockSpec((1, d), lambda i: (0, 0)),             # ln gamma (resident)
                pl.BlockSpec((1, d), lambda i: (0, 0)),             # ln beta  (resident)
                pl.BlockSpec((d, 3 * inner), lambda i: (0, 0)),     # Wqkv bf16 (resident)
                pl.BlockSpec((inner, d), lambda i: (0, 0)),         # Wo   bf16 (resident)
                pl.BlockSpec((1, d), lambda i: (0, 0)),             # bo
            ],
            out_specs=pl.BlockSpec((bt, n, d), lambda i: (i, 0, 0)),
        ),
        compiler_params=pltpu.CompilerParams(
            dimension_semantics=("parallel",),
            vmem_limit_bytes=vmem_limit,
        ),
    )(x, gamma.astype(jnp.float32), beta.astype(jnp.float32),
      wqkv.astype(compute_dtype), wo.astype(compute_dtype), bo.astype(jnp.float32))


# ----------------------------------------------------------------------------
# Transformer forward (depth x [prenorm-attn + residual, prenorm-ffn + residual])
# ----------------------------------------------------------------------------
def transformer_forward(x, params, *, heads, dim_head,
                        compute_dtype=DEFAULT_COMPUTE_DTYPE):
    for layer in params:
        x = prenorm_attention(x, layer["ln1_g"], layer["ln1_b"],
                              layer["wqkv"], layer["wo"], layer["bo"],
                              heads=heads, dim_head=dim_head,
                              compute_dtype=compute_dtype)
        x = prenorm_feed_forward(x, layer["ln2_g"], layer["ln2_b"],
                                 layer["w1"], layer["b1"], layer["w2"], layer["b2"],
                                 compute_dtype=compute_dtype)
    return x


def init_transformer_params(key, dim, depth, heads, dim_head, mlp_dim,
                            dtype=jnp.float32):
    """Deterministic init mimicking torch.nn.Linear / nn.LayerNorm defaults."""
    inner = heads * dim_head
    project_out = not (heads == 1 and dim_head == dim)
    layers = []
    for _ in range(depth):
        key, k0, k1, k2, k3, k4, k5, k6 = jax.random.split(key, 8)
        bnd_qkv = 1.0 / math.sqrt(dim)
        bnd_o = 1.0 / math.sqrt(inner)
        bnd_1 = 1.0 / math.sqrt(dim)
        bnd_2 = 1.0 / math.sqrt(mlp_dim)

        wqkv = jax.random.uniform(k0, (dim, 3 * inner), dtype, -bnd_qkv, bnd_qkv)
        if project_out:
            wo = jax.random.uniform(k1, (inner, dim), dtype, -bnd_o, bnd_o)
            bo = jax.random.uniform(k2, (1, dim), dtype, -bnd_o, bnd_o)
        else:
            # nn.Identity() -> identity projection + zero bias (mathematically identical).
            # TODO(synk): skip the dense matmul entirely in the kernel when project_out=False.
            wo = jnp.eye(dim, dtype=dtype)
            bo = jnp.zeros((1, dim), dtype)
        w1 = jax.random.uniform(k3, (dim, mlp_dim), dtype, -bnd_1, bnd_1)
        b1 = jax.random.uniform(k4, (1, mlp_dim), dtype, -bnd_1, bnd_1)
        w2 = jax.random.uniform(k5, (mlp_dim, dim), dtype, -bnd_2, bnd_2)
        b2 = jax.random.uniform(k6, (1, dim), dtype, -bnd_2, bnd_2)

        layers.append(dict(
            ln1_g=jnp.ones((1, dim), dtype), ln1_b=jnp.zeros((1, dim), dtype),
            wqkv=wqkv, wo=wo, bo=bo,
            ln2_g=jnp.ones((1, dim), dtype), ln2_b=jnp.zeros((1, dim), dtype),
            w1=w1, b1=b1, w2=w2, b2=b2,
        ))
    return layers


# ----------------------------------------------------------------------------
# Pure-JAX f32 reference (same math as the PyTorch module with dropout=0)
# ----------------------------------------------------------------------------
def reference_forward(x, params, *, heads, dim_head):
    inner = heads * dim_head
    scale = dim_head ** (-0.5)

    def ln(t, g, b):
        mu = jnp.mean(t, -1, keepdims=True)
        var = jnp.mean((t - mu) ** 2, -1, keepdims=True)
        return (t - mu) / jnp.sqrt(var + LN_EPS) * g[0] + b[0]

    for p in params:
        xn = ln(x, p["ln1_g"], p["ln1_b"])
        qkv = xn @ p["wqkv"]
        q, k, v = jnp.split(qkv, 3, axis=-1)

        def to_heads(t):
            bb, nn_, _ = t.shape
            return t.reshape(bb, nn_, heads, dim_head).transpose(0, 2, 1, 3)

        q, k, v = map(to_heads, (q, k, v))
        dots = jnp.einsum("bhnd,bhmd->bhnm", q, k) * scale
        attn = jax.nn.softmax(dots, axis=-1)
        out = jnp.einsum("bhnm,bhmd->bhnd", attn, v)
        out = out.transpose(0, 2, 1, 3).reshape(x.shape[0], x.shape[1], inner)
        x = out @ p["wo"] + p["bo"][0] + x

        xn = ln(x, p["ln2_g"], p["ln2_b"])
        h = jax.nn.gelu(xn @ p["w1"] + p["b1"][0], approximate=False)
        x = h @ p["w2"] + p["b2"][0] + x
    return x


if __name__ == "__main__":
    key = jax.random.PRNGKey(0)

    batch, seq = 2, 8
    dim, depth, heads, dim_head, mlp_dim = 32, 2, 4, 16, 64

    kx, kp = jax.random.split(key)
    x = jax.random.normal(kx, (batch, seq, dim), jnp.float32)
    params = init_transformer_params(kp, dim, depth, heads, dim_head, mlp_dim)

    y = transformer_forward(x, params, heads=heads, dim_head=dim_head)
    jax.block_until_ready(y)

    y_ref = reference_forward(x, params, heads=heads, dim_head=dim_head)
    assert y.shape == y_ref.shape
    max_err = float(jnp.max(jnp.abs(y - y_ref)))
    # bf16 MXU operands (f32 accumulation) -> looser tolerance than a pure-f32 run.
    assert jnp.allclose(y, y_ref, atol=5e-2, rtol=5e-2), (
        f"mismatch vs reference (max abs err {max_err:.3e})")

    print("KERNEL_OK")
</pallas_src>

<mosaic_0001>
module attributes {stable_mosaic.version = 11 : i64} {
  func.func @prenorm_attention_kernel(%arg0: i32, %arg1: memref<2x8x32xf32, #tpu.memory_space<vmem>>, %arg2: memref<1x32xf32, #tpu.memory_space<vmem>>, %arg3: memref<1x32xf32, #tpu.memory_space<vmem>>, %arg4: memref<32x192xbf16, #tpu.memory_space<vmem>>, %arg5: memref<64x32xbf16, #tpu.memory_space<vmem>>, %arg6: memref<1x32xf32, #tpu.memory_space<vmem>>, %arg7: memref<2x8x32xf32, #tpu.memory_space<vmem>>) attributes {dimension_semantics = [#tpu.dimension_semantics<parallel>], iteration_bounds = array<i64: 1>, scalar_prefetch = 0 : i64, scratch_operands = 0 : i64, tpu.core_type = #tpu.core_type<tc>, window_params = [{transform_indices = @transform_0, window_bounds = array<i64: 2, 8, 32>}, {pipeline_mode = #tpu.pipeline_mode<synchronous>, transform_indices = @transform_1, window_bounds = array<i64: 1, 32>}, {pipeline_mode = #tpu.pipeline_mode<synchronous>, transform_indices = @transform_2, window_bounds = array<i64: 1, 32>}, {pipeline_mode = #tpu.pipeline_mode<synchronous>, transform_indices = @transform_3, window_bounds = array<i64: 32, 192>}, {pipeline_mode = #tpu.pipeline_mode<synchronous>, transform_indices = @transform_4, window_bounds = array<i64: 64, 32>}, {pipeline_mode = #tpu.pipeline_mode<synchronous>, transform_indices = @transform_5, window_bounds = array<i64: 1, 32>}, {transform_indices = @transform_6, window_bounds = array<i64: 2, 8, 32>}]} {
    %c0 = arith.constant 0 : index
    %c0_0 = arith.constant 0 : index
    %c0_1 = arith.constant 0 : index
    %0 = vector.load %arg1[%c0, %c0_0, %c0_1] : memref<2x8x32xf32, #tpu.memory_space<vmem>>, vector<2x8x32xf32>
    %1 = vector.shape_cast %0 : vector<2x8x32xf32> to vector<16x32xf32>
    %c0_2 = arith.constant 0 : index
    %c0_3 = arith.constant 0 : index
    %2 = vector.load %arg2[%c0_2, %c0_3] : memref<1x32xf32, #tpu.memory_space<vmem>>, vector<1x32xf32>
    %c0_4 = arith.constant 0 : index
    %c0_5 = arith.constant 0 : index
    %3 = vector.load %arg3[%c0_4, %c0_5] : memref<1x32xf32, #tpu.memory_space<vmem>>, vector<1x32xf32>
    %cst = arith.constant dense<0.000000e+00> : vector<16xf32>
    %4 = vector.multi_reduction <add>, %1, %cst [1] : vector<16x32xf32> to vector<16xf32>
    %5 = vector.shape_cast %4 : vector<16xf32> to vector<16x1xf32>
    %cst_6 = arith.constant 3.200000e+01 : f32
    %6 = vector.broadcast %cst_6 : f32 to vector<16x1xf32>
    %7 = arith.divf %5, %6 : vector<16x1xf32>
    %8 = vector.broadcast %7 : vector<16x1xf32> to vector<16x32xf32>
    %9 = arith.subf %1, %8 : vector<16x32xf32>
    %10 = arith.mulf %9, %9 : vector<16x32xf32>
    %cst_7 = arith.constant dense<0.000000e+00> : vector<16xf32>
    %11 = vector.multi_reduction <add>, %10, %cst_7 [1] : vector<16x32xf32> to vector<16xf32>
    %12 = vector.shape_cast %11 : vector<16xf32> to vector<16x1xf32>
    %cst_8 = arith.constant 3.200000e+01 : f32
    %13 = vector.broadcast %cst_8 : f32 to vector<16x1xf32>
    %14 = arith.divf %12, %13 : vector<16x1xf32>
    %15 = vector.broadcast %7 : vector<16x1xf32> to vector<16x32xf32>
    %16 = arith.subf %1, %15 : vector<16x32xf32>
    %cst_9 = arith.constant 9.99999974E-6 : f32
    %17 = vector.broadcast %cst_9 : f32 to vector<16x1xf32>
    %18 = arith.addf %14, %17 : vector<16x1xf32>
    %19 = math.rsqrt %18 : vector<16x1xf32>
    %20 = vector.broadcast %19 : vector<16x1xf32> to vector<16x32xf32>
    %21 = arith.mulf %16, %20 : vector<16x32xf32>
    %22 = vector.broadcast %2 : vector<1x32xf32> to vector<16x32xf32>
    %23 = arith.mulf %21, %22 : vector<16x32xf32>
    %24 = vector.broadcast %3 : vector<1x32xf32> to vector<16x32xf32>
    %25 = arith.addf %23, %24 : vector<16x32xf32>
    %26 = arith.truncf %25 : vector<16x32xf32> to vector<16x32xbf16>
    %c0_10 = arith.constant 0 : index
    %c0_11 = arith.constant 0 : index
    %27 = vector.load %arg4[%c0_10, %c0_11] : memref<32x192xbf16, #tpu.memory_space<vmem>>, vector<32x192xbf16>
    %cst_12 = arith.constant dense<0.000000e+00> : vector<16x192xf32>
    %28 = tpu.matmul %26, %27, %cst_12 {dimension_numbers = #tpu.dot_dimension_numbers<[1], [0], [0], [1], [0, 0, 1, 1], [], []>} : vector<16x32xbf16>, vector<32x192xbf16>, vector<16x192xf32> -> vector<16x192xf32>
    %c0_13 = arith.constant 0 : index
    %c0_14 = arith.constant 0 : index
    %29 = vector.load %arg5[%c0_13, %c0_14] : memref<64x32xbf16, #tpu.memory_space<vmem>>, vector<64x32xbf16>
    %c0_15 = arith.constant 0 : index
    %c0_16 = arith.constant 0 : index
    %30 = vector.load %arg6[%c0_15, %c0_16] : memref<1x32xf32, #tpu.memory_space<vmem>>, vector<1x32xf32>
    %31 = vector.extract_strided_slice %28 {offsets = [0, 0], sizes = [8, 192], strides = [1, 1]} : vector<16x192xf32> to vector<8x192xf32>
    %32 = vector.extract_strided_slice %0 {offsets = [0, 0, 0], sizes = [1, 8, 32], strides = [1, 1, 1]} : vector<2x8x32xf32> to vector<1x8x32xf32>
    %33 = vector.shape_cast %32 : vector<1x8x32xf32> to vector<8x32xf32>
    %34 = vector.broadcast %30 : vector<1x32xf32> to vector<8x32xf32>
    %35 = arith.addf %34, %33 : vector<8x32xf32>
    %36 = vector.extract_strided_slice %31 {offsets = [0, 0], sizes = [8, 16], strides = [1, 1]} : vector<8x192xf32> to vector<8x16xf32>
    %cst_17 = arith.constant 2.500000e-01 : f32
    %37 = vector.broadcast %cst_17 : f32 to vector<8x16xf32>
    %38 = arith.mulf %36, %37 : vector<8x16xf32>
    %39 = arith.truncf %38 : vector<8x16xf32> to vector<8x16xbf16>
    %40 = vector.extract_strided_slice %31 {offsets = [0, 64], sizes = [8, 16], strides = [1, 1]} : vector<8x192xf32> to vector<8x16xf32>
    %41 = arith.truncf %40 : vector<8x16xf32> to vector<8x16xbf16>
    %42 = vector.extract_strided_slice %31 {offsets = [0, 128], sizes = [8, 16], strides = [1, 1]} : vector<8x192xf32> to vector<8x16xf32>
    %43 = arith.truncf %42 : vector<8x16xf32> to vector<8x16xbf16>
    %cst_18 = arith.constant dense<0.000000e+00> : vector<8x8xf32>
    %44 = tpu.matmul %39, %41, %cst_18 {dimension_numbers = #tpu.dot_dimension_numbers<[1], [1], [0], [0], [0, 0, 1, 0], [], []>} : vector<8x16xbf16>, vector<8x16xbf16>, vector<8x8xf32> -> vector<8x8xf32>
    %cst_19 = arith.constant dense<0xFF800000> : vector<8xf32>
    %45 = vector.multi_reduction <maximumf>, %44, %cst_19 [1] : vector<8x8xf32> to vector<8xf32>
    %46 = vector.shape_cast %45 : vector<8xf32> to vector<8x1xf32>
    %47 = vector.broadcast %46 : vector<8x1xf32> to vector<8x8xf32>
    %48 = arith.subf %44, %47 : vector<8x8xf32>
    %49 = math.exp %48 : vector<8x8xf32>
    %cst_20 = arith.constant dense<0.000000e+00> : vector<8xf32>
    %50 = vector.multi_reduction <add>, %49, %cst_20 [1] : vector<8x8xf32> to vector<8xf32>
    %51 = vector.shape_cast %50 : vector<8xf32> to vector<8x1xf32>
    %52 = tpu.reciprocal %51 {approx = true} : vector<8x1xf32> -> vector<8x1xf32>
    %53 = vector.broadcast %52 : vector<8x1xf32> to vector<8x8xf32>
    %54 = arith.mulf %49, %53 : vector<8x8xf32>
    %55 = arith.truncf %54 : vector<8x8xf32> to vector<8x8xbf16>
    %cst_21 = arith.constant dense<0.000000e+00> : vector<8x16xf32>
    %56 = tpu.matmul %55, %43, %cst_21 {dimension_numbers = #tpu.dot_dimension_numbers<[1], [0], [0], [1], [0, 0, 1, 1], [], []>} : vector<8x8xbf16>, vector<8x16xbf16>, vector<8x16xf32> -> vector<8x16xf32>
    %57 = arith.truncf %56 : vector<8x16xf32> to vector<8x16xbf16>
    %58 = vector.extract_strided_slice %29 {offsets = [0, 0], sizes = [16, 32], strides = [1, 1]} : vector<64x32xbf16> to vector<16x32xbf16>
    %cst_22 = arith.constant dense<0.000000e+00> : vector<8x32xf32>
    %59 = tpu.matmul %57, %58, %cst_22 {dimension_numbers = #tpu.dot_dimension_numbers<[1], [0], [0], [1], [0, 0, 1, 1], [], []>} : vector<8x16xbf16>, vector<16x32xbf16>, vector<8x32xf32> -> vector<8x32xf32>
    %60 = arith.addf %35, %59 : vector<8x32xf32>
    %61 = vector.extract_strided_slice %31 {offsets = [0, 16], sizes = [8, 16], strides = [1, 1]} : vector<8x192xf32> to vector<8x16xf32>
    %cst_23 = arith.constant 2.500000e-01 : f32
    %62 = vector.broadcast %cst_23 : f32 to vector<8x16xf32>
    %63 = arith.mulf %61, %62 : vector<8x16xf32>
    %64 = arith.truncf %63 : vector<8x16xf32> to vector<8x16xbf16>
    %65 = vector.extract_strided_slice %31 {offsets = [0, 80], sizes = [8, 16], strides = [1, 1]} : vector<8x192xf32> to vector<8x16xf32>
    %66 = arith.truncf %65 : vector<8x16xf32> to vector<8x16xbf16>
    %67 = vector.extract_strided_slice %31 {offsets = [0, 144], sizes = [8, 16], strides = [1, 1]} : vector<8x192xf32> to vector<8x16xf32>
    %68 = arith.truncf %67 : vector<8x16xf32> to vector<8x16xbf16>
    %cst_24 = arith.constant dense<0.000000e+00> : vector<8x8xf32>
    %69 = tpu.matmul %64, %66, %cst_24 {dimension_numbers = #tpu.dot_dimension_numbers<[1], [1], [0], [0], [0, 0, 1, 0], [], []>} : vector<8x16xbf16>, vector<8x16xbf16>, vector<8x8xf32> -> vector<8x8xf32>
    %cst_25 = arith.constant dense<0xFF800000> : vector<8xf32>
    %70 = vector.multi_reduction <maximumf>, %69, %cst_25 [1] : vector<8x8xf32> to vector<8xf32>
    %71 = vector.shape_cast %70 : vector<8xf32> to vector<8x1xf32>
    %72 = vector.broadcast %71 : vector<8x1xf32> to vector<8x8xf32>
    %73 = arith.subf %69, %72 : vector<8x8xf32>
    %74 = math.exp %73 : vector<8x8xf32>
    %cst_26 = arith.constant dense<0.000000e+00> : vector<8xf32>
    %75 = vector.multi_reduction <add>, %74, %cst_26 [1] : vector<8x8xf32> to vector<8xf32>
    %76 = vector.shape_cast %75 : vector<8xf32> to vector<8x1xf32>
    %77 = tpu.reciprocal %76 {approx = true} : vector<8x1xf32> -> vector<8x1xf32>
    %78 = vector.broadcast %77 : vector<8x1xf32> to vector<8x8xf32>
    %79 = arith.mulf %74, %78 : vector<8x8xf32>
    %80 = arith.truncf %79 : vector<8x8xf32> to vector<8x8xbf16>
    %cst_27 = arith.constant dense<0.000000e+00> : vector<8x16xf32>
    %81 = tpu.matmul %80, %68, %cst_27 {dimension_numbers = #tpu.dot_dimension_numbers<[1], [0], [0], [1], [0, 0, 1, 1], [], []>} : vector<8x8xbf16>, vector<8x16xbf16>, vector<8x16xf32> -> vector<8x16xf32>
    %82 = arith.truncf %81 : vector<8x16xf32> to vector<8x16xbf16>
    %83 = vector.extract_strided_slice %29 {offsets = [16, 0], sizes = [16, 32], strides = [1, 1]} : vector<64x32xbf16> to vector<16x32xbf16>
    %cst_28 = arith.constant dense<0.000000e+00> : vector<8x32xf32>
    %84 = tpu.matmul %82, %83, %cst_28 {dimension_numbers = #tpu.dot_dimension_numbers<[1], [0], [0], [1], [0, 0, 1, 1], [], []>} : vector<8x16xbf16>, vector<16x32xbf16>, vector<8x32xf32> -> vector<8x32xf32>
    %85 = arith.addf %60, %84 : vector<8x32xf32>
    %86 = vector.extract_strided_slice %31 {offsets = [0, 32], sizes = [8, 16], strides = [1, 1]} : vector<8x192xf32> to vector<8x16xf32>
    %cst_29 = arith.constant 2.500000e-01 : f32
    %87 = vector.broadcast %cst_29 : f32 to vector<8x16xf32>
    %88 = arith.mulf %86, %87 : vector<8x16xf32>
    %89 = arith.truncf %88 : vector<8x16xf32> to vector<8x16xbf16>
    %90 = vector.extract_strided_slice %31 {offsets = [0, 96], sizes = [8, 16], strides = [1, 1]} : vector<8x192xf32> to vector<8x16xf32>
    %91 = arith.truncf %90 : vector<8x16xf32> to vector<8x16xbf16>
    %92 = vector.extract_strided_slice %31 {offsets = [0, 160], sizes = [8, 16], strides = [1, 1]} : vector<8x192xf32> to vector<8x16xf32>
    %93 = arith.truncf %92 : vector<8x16xf32> to vector<8x16xbf16>
    %cst_30 = arith.constant dense<0.000000e+00> : vector<8x8xf32>
    %94 = tpu.matmul %89, %91, %cst_30 {dimension_numbers = #tpu.dot_dimension_numbers<[1], [1], [0], [0], [0, 0, 1, 0], [], []>} : vector<8x16xbf16>, vector<8x16xbf16>, vector<8x8xf32> -> vector<8x8xf32>
    %cst_31 = arith.constant dense<0xFF800000> : vector<8xf32>
    %95 = vector.multi_reduction <maximumf>, %94, %cst_31 [1] : vector<8x8xf32> to vector<8xf32>
    %96 = vector.shape_cast %95 : vector<8xf32> to vector<8x1xf32>
    %97 = vector.broadcast %96 : vector<8x1xf32> to vector<8x8xf32>
    %98 = arith.subf %94, %97 : vector<8x8xf32>
    %99 = math.exp %98 : vector<8x8xf32>
    %cst_32 = arith.constant dense<0.000000e+00> : vector<8xf32>
    %100 = vector.multi_reduction <add>, %99, %cst_32 [1] : vector<8x8xf32> to vector<8xf32>
    %101 = vector.shape_cast %100 : vector<8xf32> to vector<8x1xf32>
    %102 = tpu.reciprocal %101 {approx = true} : vector<8x1xf32> -> vector<8x1xf32>
    %103 = vector.broadcast %102 : vector<8x1xf32> to vector<8x8xf32>
    %104 = arith.mulf %99, %103 : vector<8x8xf32>
    %105 = arith.truncf %104 : vector<8x8xf32> to vector<8x8xbf16>
    %cst_33 = arith.constant dense<0.000000e+00> : vector<8x16xf32>
    %106 = tpu.matmul %105, %93, %cst_33 {dimension_numbers = #tpu.dot_dimension_numbers<[1], [0], [0], [1], [0, 0, 1, 1], [], []>} : vector<8x8xbf16>, vector<8x16xbf16>, vector<8x16xf32> -> vector<8x16xf32>
    %107 = arith.truncf %106 : vector<8x16xf32> to vector<8x16xbf16>
    %108 = vector.extract_strided_slice %29 {offsets = [32, 0], sizes = [16, 32], strides = [1, 1]} : vector<64x32xbf16> to vector<16x32xbf16>
    %cst_34 = arith.constant dense<0.000000e+00> : vector<8x32xf32>
    %109 = tpu.matmul %107, %108, %cst_34 {dimension_numbers = #tpu.dot_dimension_numbers<[1], [0], [0], [1], [0, 0, 1, 1], [], []>} : vector<8x16xbf16>, vector<16x32xbf16>, vector<8x32xf32> -> vector<8x32xf32>
    %110 = arith.addf %85, %109 : vector<8x32xf32>
    %111 = vector.extract_strided_slice %31 {offsets = [0, 48], sizes = [8, 16], strides = [1, 1]} : vector<8x192xf32> to vector<8x16xf32>
    %cst_35 = arith.constant 2.500000e-01 : f32
    %112 = vector.broadcast %cst_35 : f32 to vector<8x16xf32>
    %113 = arith.mulf %111, %112 : vector<8x16xf32>
    %114 = arith.truncf %113 : vector<8x16xf32> to vector<8x16xbf16>
    %115 = vector.extract_strided_slice %31 {offsets = [0, 112], sizes = [8, 16], strides = [1, 1]} : vector<8x192xf32> to vector<8x16xf32>
    %116 = arith.truncf %115 : vector<8x16xf32> to vector<8x16xbf16>
    %117 = vector.extract_strided_slice %31 {offsets = [0, 176], sizes = [8, 16], strides = [1, 1]} : vector<8x192xf32> to vector<8x16xf32>
    %118 = arith.truncf %117 : vector<8x16xf32> to vector<8x16xbf16>
    %cst_36 = arith.constant dense<0.000000e+00> : vector<8x8xf32>
    %119 = tpu.matmul %114, %116, %cst_36 {dimension_numbers = #tpu.dot_dimension_numbers<[1], [1], [0], [0], [0, 0, 1, 0], [], []>} : vector<8x16xbf16>, vector<8x16xbf16>, vector<8x8xf32> -> vector<8x8xf32>
    %cst_37 = arith.constant dense<0xFF800000> : vector<8xf32>
    %120 = vector.multi_reduction <maximumf>, %119, %cst_37 [1] : vector<8x8xf32> to vector<8xf32>
    %121 = vector.shape_cast %120 : vector<8xf32> to vector<8x1xf32>
    %122 = vector.broadcast %121 : vector<8x1xf32> to vector<8x8xf32>
    %123 = arith.subf %119, %122 : vector<8x8xf32>
    %124 = math.exp %123 : vector<8x8xf32>
    %cst_38 = arith.constant dense<0.000000e+00> : vector<8xf32>
    %125 = vector.multi_reduction <add>, %124, %cst_38 [1] : vector<8x8xf32> to vector<8xf32>
    %126 = vector.shape_cast %125 : vector<8xf32> to vector<8x1xf32>
    %127 = tpu.reciprocal %126 {approx = true} : vector<8x1xf32> -> vector<8x1xf32>
    %128 = vector.broadcast %127 : vector<8x1xf32> to vector<8x8xf32>
    %129 = arith.mulf %124, %128 : vector<8x8xf32>
    %130 = arith.truncf %129 : vector<8x8xf32> to vector<8x8xbf16>
    %cst_39 = arith.constant dense<0.000000e+00> : vector<8x16xf32>
    %131 = tpu.matmul %130, %118, %cst_39 {dimension_numbers = #tpu.dot_dimension_numbers<[1], [0], [0], [1], [0, 0, 1, 1], [], []>} : vector<8x8xbf16>, vector<8x16xbf16>, vector<8x16xf32> -> vector<8x16xf32>
    %132 = arith.truncf %131 : vector<8x16xf32> to vector<8x16xbf16>
    %133 = vector.extract_strided_slice %29 {offsets = [48, 0], sizes = [16, 32], strides = [1, 1]} : vector<64x32xbf16> to vector<16x32xbf16>
    %cst_40 = arith.constant dense<0.000000e+00> : vector<8x32xf32>
    %134 = tpu.matmul %132, %133, %cst_40 {dimension_numbers = #tpu.dot_dimension_numbers<[1], [0], [0], [1], [0, 0, 1, 1], [], []>} : vector<8x16xbf16>, vector<16x32xbf16>, vector<8x32xf32> -> vector<8x32xf32>
    %135 = arith.addf %110, %134 : vector<8x32xf32>
    %c0_41 = arith.constant 0 : index
    %c0_42 = arith.constant 0 : index
    %c0_43 = arith.constant 0 : index
    %136 = vector.load %arg7[%c0_41, %c0_42, %c0_43] : memref<2x8x32xf32, #tpu.memory_space<vmem>>, vector<1x8x32xf32>
    %137 = vector.shape_cast %136 : vector<1x8x32xf32> to vector<8x32xf32>
    %138 = vector.shape_cast %135 : vector<8x32xf32> to vector<1x8x32xf32>
    tpu.vector_store %arg7[%c0_41, %c0_42, %c0_43], %138 {strides = array<i32>} : memref<2x8x32xf32, #tpu.memory_space<vmem>>, vector<1x8x32xf32>,
    %139 = vector.extract_strided_slice %28 {offsets = [8, 0], sizes = [8, 192], strides = [1, 1]} : vector<16x192xf32> to vector<8x192xf32>
    %140 = vector.extract_strided_slice %0 {offsets = [1, 0, 0], sizes = [1, 8, 32], strides = [1, 1, 1]} : vector<2x8x32xf32> to vector<1x8x32xf32>
    %141 = vector.shape_cast %140 : vector<1x8x32xf32> to vector<8x32xf32>
    %142 = vector.broadcast %30 : vector<1x32xf32> to vector<8x32xf32>
    %143 = arith.addf %142, %141 : vector<8x32xf32>
    %144 = vector.extract_strided_slice %139 {offsets = [0, 0], sizes = [8, 16], strides = [1, 1]} : vector<8x192xf32> to vector<8x16xf32>
    %cst_44 = arith.constant 2.500000e-01 : f32
    %145 = vector.broadcast %cst_44 : f32 to vector<8x16xf32>
    %146 = arith.mulf %144, %145 : vector<8x16xf32>
    %147 = arith.truncf %146 : vector<8x16xf32> to vector<8x16xbf16>
    %148 = vector.extract_strided_slice %139 {offsets = [0, 64], sizes = [8, 16], strides = [1, 1]} : vector<8x192xf32> to vector<8x16xf32>
    %149 = arith.truncf %148 : vector<8x16xf32> to vector<8x16xbf16>
    %150 = vector.extract_strided_slice %139 {offsets = [0, 128], sizes = [8, 16], strides = [1, 1]} : vector<8x192xf32> to vector<8x16xf32>
    %151 = arith.truncf %150 : vector<8x16xf32> to vector<8x16xbf16>
    %cst_45 = arith.constant dense<0.000000e+00> : vector<8x8xf32>
    %152 = tpu.matmul %147, %149, %cst_45 {dimension_numbers = #tpu.dot_dimension_numbers<[1], [1], [0], [0], [0, 0, 1, 0], [], []>} : vector<8x16xbf16>, vector<8x16xbf16>, vector<8x8xf32> -> vector<8x8xf32>
    %cst_46 = arith.constant dense<0xFF800000> : vector<8xf32>
    %153 = vector.multi_reduction <maximumf>, %152, %cst_46 [1] : vector<8x8xf32> to vector<8xf32>
    %154 = vector.shape_cast %153 : vector<8xf32> to vector<8x1xf32>
    %155 = vector.broadcast %154 : vector<8x1xf32> to vector<8x8xf32>
    %156 = arith.subf %152, %155 : vector<8x8xf32>
    %157 = math.exp %156 : vector<8x8xf32>
    %cst_47 = arith.constant dense<0.000000e+00> : vector<8xf32>
    %158 = vector.multi_reduction <add>, %157, %cst_47 [1] : vector<8x8xf32> to vector<8xf32>
    %159 = vector.shape_cast %158 : vector<8xf32> to vector<8x1xf32>
    %160 = tpu.reciprocal %159 {approx = true} : vector<8x1xf32> -> vector<8x1xf32>
    %161 = vector.broadcast %160 : vector<8x1xf32> to vector<8x8xf32>
    %162 = arith.mulf %157, %161 : vector<8x8xf32>
    %163 = arith.truncf %162 : vector<8x8xf32> to vector<8x8xbf16>
    %cst_48 = arith.constant dense<0.000000e+00> : vector<8x16xf32>
    %164 = tpu.matmul %163, %151, %cst_48 {dimension_numbers = #tpu.dot_dimension_numbers<[1], [0], [0], [1], [0, 0, 1, 1], [], []>} : vector<8x8xbf16>, vector<8x16xbf16>, vector<8x16xf32> -> vector<8x16xf32>
    %165 = arith.truncf %164 : vector<8x16xf32> to vector<8x16xbf16>
    %166 = vector.extract_strided_slice %29 {offsets = [0, 0], sizes = [16, 32], strides = [1, 1]} : vector<64x32xbf16> to vector<16x32xbf16>
    %cst_49 = arith.constant dense<0.000000e+00> : vector<8x32xf32>
    %167 = tpu.matmul %165, %166, %cst_49 {dimension_numbers = #tpu.dot_dimension_numbers<[1], [0], [0], [1], [0, 0, 1, 1], [], []>} : vector<8x16xbf16>, vector<16x32xbf16>, vector<8x32xf32> -> vector<8x32xf32>
    %168 = arith.addf %143, %167 : vector<8x32xf32>
    %169 = vector.extract_strided_slice %139 {offsets = [0, 16], sizes = [8, 16], strides = [1, 1]} : vector<8x192xf32> to vector<8x16xf32>
    %cst_50 = arith.constant 2.500000e-01 : f32
    %170 = vector.broadcast %cst_50 : f32 to vector<8x16xf32>
    %171 = arith.mulf %169, %170 : vector<8x16xf32>
    %172 = arith.truncf %171 : vector<8x16xf32> to vector<8x16xbf16>
    %173 = vector.extract_strided_slice %139 {offsets = [0, 80], sizes = [8, 16], strides = [1, 1]} : vector<8x192xf32> to vector<8x16xf32>
    %174 = arith.truncf %173 : vector<8x16xf32> to vector<8x16xbf16>
    %175 = vector.extract_strided_slice %139 {offsets = [0, 144], sizes = [8, 16], strides = [1, 1]} : vector<8x192xf32> to vector<8x16xf32>
    %176 = arith.truncf %175 : vector<8x16xf32> to vector<8x16xbf16>
    %cst_51 = arith.constant dense<0.000000e+00> : vector<8x8xf32>
    %177 = tpu.matmul %172, %174, %cst_51 {dimension_numbers = #tpu.dot_dimension_numbers<[1], [1], [0], [0], [0, 0, 1, 0], [], []>} : vector<8x16xbf16>, vector<8x16xbf16>, vector<8x8xf32> -> vector<8x8xf32>
    %cst_52 = arith.constant dense<0xFF800000> : vector<8xf32>
    %178 = vector.multi_reduction <maximumf>, %177, %cst_52 [1] : vector<8x8xf32> to vector<8xf32>
    %179 = vector.shape_cast %178 : vector<8xf32> to vector<8x1xf32>
    %180 = vector.broadcast %179 : vector<8x1xf32> to vector<8x8xf32>
    %181 = arith.subf %177, %180 : vector<8x8xf32>
    %182 = math.exp %181 : vector<8x8xf32>
    %cst_53 = arith.constant dense<0.000000e+00> : vector<8xf32>
    %183 = vector.multi_reduction <add>, %182, %cst_53 [1] : vector<8x8xf32> to vector<8xf32>
    %184 = vector.shape_cast %183 : vector<8xf32> to vector<8x1xf32>
    %185 = tpu.reciprocal %184 {approx = true} : vector<8x1xf32> -> vector<8x1xf32>
    %186 = vector.broadcast %185 : vector<8x1xf32> to vector<8x8xf32>
    %187 = arith.mulf %182, %186 : vector<8x8xf32>
    %188 = arith.truncf %187 : vector<8x8xf32> to vector<8x8xbf16>
    %cst_54 = arith.constant dense<0.000000e+00> : vector<8x16xf32>
    %189 = tpu.matmul %188, %176, %cst_54 {dimension_numbers = #tpu.dot_dimension_numbers<[1], [0], [0], [1], [0, 0, 1, 1], [], []>} : vector<8x8xbf16>, vector<8x16xbf16>, vector<8x16xf32> -> vector<8x16xf32>
    %190 = arith.truncf %189 : vector<8x16xf32> to vector<8x16xbf16>
    %191 = vector.extract_strided_slice %29 {offsets = [16, 0], sizes = [16, 32], strides = [1, 1]} : vector<64x32xbf16> to vector<16x32xbf16>
    %cst_55 = arith.constant dense<0.000000e+00> : vector<8x32xf32>
    %192 = tpu.matmul %190, %191, %cst_55 {dimension_numbers = #tpu.dot_dimension_numbers<[1], [0], [0], [1], [0, 0, 1, 1], [], []>} : vector<8x16xbf16>, vector<16x32xbf16>, vector<8x32xf32> -> vector<8x32xf32>
    %193 = arith.addf %168, %192 : vector<8x32xf32>
    %194 = vector.extract_strided_slice %139 {offsets = [0, 32], sizes = [8, 16], strides = [1, 1]} : vector<8x192xf32> to vector<8x16xf32>
    %cst_56 = arith.constant 2.500000e-01 : f32
    %195 = vector.broadcast %cst_56 : f32 to vector<8x16xf32>
    %196 = arith.mulf %194, %195 : vector<8x16xf32>
    %197 = arith.truncf %196 : vector<8x16xf32> to vector<8x16xbf16>
    %198 = vector.extract_strided_slice %139 {offsets = [0, 96], sizes = [8, 16], strides = [1, 1]} : vector<8x192xf32> to vector<8x16xf32>
    %199 = arith.truncf %198 : vector<8x16xf32> to vector<8x16xbf16>
    %200 = vector.extract_strided_slice %139 {offsets = [0, 160], sizes = [8, 16], strides = [1, 1]} : vector<8x192xf32> to vector<8x16xf32>
    %201 = arith.truncf %200 : vector<8x16xf32> to vector<8x16xbf16>
    %cst_57 = arith.constant dense<0.000000e+00> : vector<8x8xf32>
    %202 = tpu.matmul %197, %199, %cst_57 {dimension_numbers = #tpu.dot_dimension_numbers<[1], [1], [0], [0], [0, 0, 1, 0], [], []>} : vector<8x16xbf16>, vector<8x16xbf16>, vector<8x8xf32> -> vector<8x8xf32>
    %cst_58 = arith.constant dense<0xFF800000> : vector<8xf32>
    %203 = vector.multi_reduction <maximumf>, %202, %cst_58 [1] : vector<8x8xf32> to vector<8xf32>
    %204 = vector.shape_cast %203 : vector<8xf32> to vector<8x1xf32>
    %205 = vector.broadcast %204 : vector<8x1xf32> to vector<8x8xf32>
    %206 = arith.subf %202, %205 : vector<8x8xf32>
    %207 = math.exp %206 : vector<8x8xf32>
    %cst_59 = arith.constant dense<0.000000e+00> : vector<8xf32>
    %208 = vector.multi_reduction <add>, %207, %cst_59 [1] : vector<8x8xf32> to vector<8xf32>
    %209 = vector.shape_cast %208 : vector<8xf32> to vector<8x1xf32>
    %210 = tpu.reciprocal %209 {approx = true} : vector<8x1xf32> -> vector<8x1xf32>
    %211 = vector.broadcast %210 : vector<8x1xf32> to vector<8x8xf32>
    %212 = arith.mulf %207, %211 : vector<8x8xf32>
    %213 = arith.truncf %212 : vector<8x8xf32> to vector<8x8xbf16>
    %cst_60 = arith.constant dense<0.000000e+00> : vector<8x16xf32>
    %214 = tpu.matmul %213, %201, %cst_60 {dimension_numbers = #tpu.dot_dimension_numbers<[1], [0], [0], [1], [0, 0, 1, 1], [], []>} : vector<8x8xbf16>, vector<8x16xbf16>, vector<8x16xf32> -> vector<8x16xf32>
    %215 = arith.truncf %214 : vector<8x16xf32> to vector<8x16xbf16>
    %216 = vector.extract_strided_slice %29 {offsets = [32, 0], sizes = [16, 32], strides = [1, 1]} : vector<64x32xbf16> to vector<16x32xbf16>
    %cst_61 = arith.constant dense<0.000000e+00> : vector<8x32xf32>
    %217 = tpu.matmul %215, %216, %cst_61 {dimension_numbers = #tpu.dot_dimension_numbers<[1], [0], [0], [1], [0, 0, 1, 1], [], []>} : vector<8x16xbf16>, vector<16x32xbf16>, vector<8x32xf32> -> vector<8x32xf32>
    %218 = arith.addf %193, %217 : vector<8x32xf32>
    %219 = vector.extract_strided_slice %139 {offsets = [0, 48], sizes = [8, 16], strides = [1, 1]} : vector<8x192xf32> to vector<8x16xf32>
    %cst_62 = arith.constant 2.500000e-01 : f32
    %220 = vector.broadcast %cst_62 : f32 to vector<8x16xf32>
    %221 = arith.mulf %219, %220 : vector<8x16xf32>
    %222 = arith.truncf %221 : vector<8x16xf32> to vector<8x16xbf16>
    %223 = vector.extract_strided_slice %139 {offsets = [0, 112], sizes = [8, 16], strides = [1, 1]} : vector<8x192xf32> to vector<8x16xf32>
    %224 = arith.truncf %223 : vector<8x16xf32> to vector<8x16xbf16>
    %225 = vector.extract_strided_slice %139 {offsets = [0, 176], sizes = [8, 16], strides = [1, 1]} : vector<8x192xf32> to vector<8x16xf32>
    %226 = arith.truncf %225 : vector<8x16xf32> to vector<8x16xbf16>
    %cst_63 = arith.constant dense<0.000000e+00> : vector<8x8xf32>
    %227 = tpu.matmul %222, %224, %cst_63 {dimension_numbers = #tpu.dot_dimension_numbers<[1], [1], [0], [0], [0, 0, 1, 0], [], []>} : vector<8x16xbf16>, vector<8x16xbf16>, vector<8x8xf32> -> vector<8x8xf32>
    %cst_64 = arith.constant dense<0xFF800000> : vector<8xf32>
    %228 = vector.multi_reduction <maximumf>, %227, %cst_64 [1] : vector<8x8xf32> to vector<8xf32>
    %229 = vector.shape_cast %228 : vector<8xf32> to vector<8x1xf32>
    %230 = vector.broadcast %229 : vector<8x1xf32> to vector<8x8xf32>
    %231 = arith.subf %227, %230 : vector<8x8xf32>
    %232 = math.exp %231 : vector<8x8xf32>
    %cst_65 = arith.constant dense<0.000000e+00> : vector<8xf32>
    %233 = vector.multi_reduction <add>, %232, %cst_65 [1] : vector<8x8xf32> to vector<8xf32>
    %234 = vector.shape_cast %233 : vector<8xf32> to vector<8x1xf32>
    %235 = tpu.reciprocal %234 {approx = true} : vector<8x1xf32> -> vector<8x1xf32>
    %236 = vector.broadcast %235 : vector<8x1xf32> to vector<8x8xf32>
    %237 = arith.mulf %232, %236 : vector<8x8xf32>
    %238 = arith.truncf %237 : vector<8x8xf32> to vector<8x8xbf16>
    %cst_66 = arith.constant dense<0.000000e+00> : vector<8x16xf32>
    %239 = tpu.matmul %238, %226, %cst_66 {dimension_numbers = #tpu.dot_dimension_numbers<[1], [0], [0], [1], [0, 0, 1, 1], [], []>} : vector<8x8xbf16>, vector<8x16xbf16>, vector<8x16xf32> -> vector<8x16xf32>
    %240 = arith.truncf %239 : vector<8x16xf32> to vector<8x16xbf16>
    %241 = vector.extract_strided_slice %29 {offsets = [48, 0], sizes = [16, 32], strides = [1, 1]} : vector<64x32xbf16> to vector<16x32xbf16>
    %cst_67 = arith.constant dense<0.000000e+00> : vector<8x32xf32>
    %242 = tpu.matmul %240, %241, %cst_67 {dimension_numbers = #tpu.dot_dimension_numbers<[1], [0], [0], [1], [0, 0, 1, 1], [], []>} : vector<8x16xbf16>, vector<16x32xbf16>, vector<8x32xf32> -> vector<8x32xf32>
    %243 = arith.addf %218, %242 : vector<8x32xf32>
    %c1 = arith.constant 1 : index
    %c0_68 = arith.constant 0 : index
    %c0_69 = arith.constant 0 : index
    %244 = vector.load %arg7[%c1, %c0_68, %c0_69] : memref<2x8x32xf32, #tpu.memory_space<vmem>>, vector<1x8x32xf32>
    %245 = vector.shape_cast %244 : vector<1x8x32xf32> to vector<8x32xf32>
    %246 = vector.shape_cast %243 : vector<8x32xf32> to vector<1x8x32xf32>
    tpu.vector_store %arg7[%c1, %c0_68, %c0_69], %246 {strides = array<i32>} : memref<2x8x32xf32, #tpu.memory_space<vmem>>, vector<1x8x32xf32>,
    return
  }
  func.func @transform_0(%arg0: i32) -> (i32, i32, i32) {
    %c0_i32 = arith.constant 0 : i32
    %c0_i32_0 = arith.constant 0 : i32
    %c0_i32_1 = arith.constant 0 : i32
    return %arg0, %c0_i32, %c0_i32_0 : i32, i32, i32
  }
  func.func @transform_1(%arg0: i32) -> (i32, i32) {
    %c0_i32 = arith.constant 0 : i32
    %c0_i32_0 = arith.constant 0 : i32
    %c0_i32_1 = arith.constant 0 : i32
    return %c0_i32, %c0_i32_0 : i32, i32
  }
  func.func @transform_2(%arg0: i32) -> (i32, i32) {
    %c0_i32 = arith.constant 0 : i32
    %c0_i32_0 = arith.constant 0 : i32
    %c0_i32_1 = arith.constant 0 : i32
    return %c0_i32, %c0_i32_0 : i32, i32
  }
  func.func @transform_3(%arg0: i32) -> (i32, i32) {
    %c0_i32 = arith.constant 0 : i32
    %c0_i32_0 = arith.constant 0 : i32
    %c0_i32_1 = arith.constant 0 : i32
    return %c0_i32, %c0_i32_0 : i32, i32
  }
  func.func @transform_4(%arg0: i32) -> (i32, i32) {
    %c0_i32 = arith.constant 0 : i32
    %c0_i32_0 = arith.constant 0 : i32
    %c0_i32_1 = arith.constant 0 : i32
    return %c0_i32, %c0_i32_0 : i32, i32
  }
  func.func @transform_5(%arg0: i32) -> (i32, i32) {
    %c0_i32 = arith.constant 0 : i32
    %c0_i32_0 = arith.constant 0 : i32
    %c0_i32_1 = arith.constant 0 : i32
    return %c0_i32, %c0_i32_0 : i32, i32
  }
  func.func @transform_6(%arg0: i32) -> (i32, i32, i32) {
    %c0_i32 = arith.constant 0 : i32
    %c0_i32_0 = arith.constant 0 : i32
    %c0_i32_1 = arith.constant 0 : i32
    return %arg0, %c0_i32, %c0_i32_0 : i32, i32, i32
  }
}

</mosaic_0001>

<llo_original>
// kernel: tpu_custom_call.1
$region0: #{tpu_custom_call.1}
  #allocation0 [shape = 'u32[]', space=smem, size = 0x4, offset = 0x4, fixed_abs, tag = 'smem constant byte address 0x4 - core index']
  #allocation1 [shape = 'u32[144,128]{1,0:T(1,128)}', space=vmem, size = 0x12000, scoped, tag = 'internal scratch']
  %s0 = inlined_call_operand.vmem [shape: f32[2,8,32], index: 0, kind: input, shape index: {}]
  %s1 = inlined_call_operand.vmem [shape: f32[1,32], index: 1, kind: input, shape index: {}]
  %s2 = inlined_call_operand.vmem [shape: f32[1,32], index: 2, kind: input, shape index: {}]
  %s3 = inlined_call_operand.vmem [shape: bf16[32,192], index: 3, kind: input, shape index: {}]
  %s4 = inlined_call_operand.vmem [shape: bf16[64,32], index: 4, kind: input, shape index: {}]
  %s5 = inlined_call_operand.vmem [shape: f32[1,32], index: 5, kind: input, shape index: {}]
  %s6 = inlined_call_operand.hbm [shape: f32[2,8,32], index: 6, kind: output, shape index: {}]
  %s7 = sld [smem:[#allocation0]]
  $region34: #{tpu_custom_call.1} parent=0
    _
  %s9 = ssub.s32 1, %s7
  %s10 = scalar_select 0, %s9, %s7
  $region1: #{tpu_custom_call.1} parent=0
    #allocation2 [shape = 'u8[8192]{0}', space=vmem, size = 0x2000, scoped, tag = 'output window, operand 0, single buffered']
    #allocation3 [shape = 's32[1]{0}', space=sflag, size = 0x4, scoped, tag = 'scoped memory for tpu_custom_call.1']
    %11 = vsyncpa [#allocation3], 0
    // Predicated region
    $region2: #{tpu_custom_call.1} parent=1 // pred_check
      _
    $region3: #{tpu_custom_call.1} parent=1 // pred_check_branch
      %13 = sbr.rel (0) target = $region5
    $region4: #{tpu_custom_call.1} parent=1 // pred_region
      _
    $region5: #{tpu_custom_call.1} parent=1 // pred_fallthru
      _
    // Predicated region
    $region6: #{tpu_custom_call.1} parent=1 // pred_check
      _
    $region7: #{tpu_custom_call.1} parent=1 // pred_check_branch
      %15 = sbr.rel (0) target = $region9
    $region8: #{tpu_custom_call.1} parent=1 // pred_region
      _
    $region9: #{tpu_custom_call.1} parent=1 // pred_fallthru
      _
    // Predicated region
    $region10: #{tpu_custom_call.1} parent=1 // pred_check
      _
    $region11: #{tpu_custom_call.1} parent=1 // pred_check_branch
      %17 = sbr.rel (0) target = $region13
    $region12: #{tpu_custom_call.1} parent=1 // pred_region
      _
    $region13: #{tpu_custom_call.1} parent=1 // pred_fallthru
      _
    // Predicated region
    $region14: #{tpu_custom_call.1} parent=1 // pred_check
      _
    $region15: #{tpu_custom_call.1} parent=1 // pred_check_branch
      %19 = sbr.rel (0) target = $region17
    $region16: #{tpu_custom_call.1} parent=1 // pred_region
      _
    $region17: #{tpu_custom_call.1} parent=1 // pred_fallthru
      _
    // Predicated region
    $region18: #{tpu_custom_call.1} parent=1 // pred_check
      _
    $region19: #{tpu_custom_call.1} parent=1 // pred_check_branch
      %21 = sbr.rel (0) target = $region21
    $region20: #{tpu_custom_call.1} parent=1 // pred_region
      _
    $region21: #{tpu_custom_call.1} parent=1 // pred_fallthru
      _
    // Predicated region
    $region22: #{tpu_custom_call.1} parent=1 // pred_check
      _
    $region23: #{tpu_custom_call.1} parent=1 // pred_check_branch
      %23 = sbr.rel (0) target = $region25
    $region24: #{tpu_custom_call.1} parent=1 // pred_region
      _
    $region25: #{tpu_custom_call.1} parent=1 // pred_fallthru
      _
    %v25 = vld [vmem:[%s0] sm:$0xff]
    %v26 = vld [vmem:[%s0 + $0x8] sm:$0xff]
    %v27 = vld [vmem:[%s1] sm:$0x1]
    %v28 = vld [vmem:[%s2] sm:$0x1]
    %vm29 = vcmask 261120
    %v30 = vsel %vm29, %v25, 0.0
    %31 = vadd.xlane.f32.xlu0 %v30
    %v32 = vpop.xlane.xlu0 %31
    %v33 = vsel %vm29, %v26, 0.0
    %34 = vadd.xlane.f32.xlu0 %v33
    %v35 = vpop.xlane.xlu0 %34
    %v36 = vrcp.pop 32.0
    %v37 = vmul.f32 %v32, %v36
    %v38 = vmul.f32 %v35, %v36
    %v39 = vsub.f32 %v25, %v37
    %v40 = vsub.f32 %v26, %v38
    %v41 = vmul.f32 %v39, %v39
    %v42 = vmul.f32 %v40, %v40
    %v43 = vsel %vm29, %v41, 0.0
    %44 = vadd.xlane.f32.xlu0 %v43
    %v45 = vpop.xlane.xlu0 %44
    %v46 = vsel %vm29, %v42, 0.0
    %47 = vadd.xlane.f32.xlu0 %v46
    %v48 = vpop.xlane.xlu0 %47
    %v49 = vmul.f32 %v45, %v36
    %v50 = vmul.f32 %v48, %v36
    %v51 = vadd.f32 %v49, 1e-05
    %v52 = vadd.f32 %v50, 1e-05
    %v53 = vrsqrt.pop %v51
    %v54 = vrsqrt.pop %v52
    %v55 = vmul.f32 %v39, %v53
    %v56 = vmul.f32 %v40, %v54
    %v58 = vlaneseq
    %v59 = vshrl.u32 %v58, 7
    %v60 = vsub.s32 0, %v59
    %v61 = vrot.slane %v27, %v60
    %v63 = vmul.f32 %v55, %v61
    %v64 = vmul.f32 %v56, %v61
    %v66 = vlaneseq
    %v67 = vshrl.u32 %v66, 7
    %v68 = vsub.s32 0, %v67
    %v69 = vrot.slane %v28, %v68
    %v71 = vadd.f32 %v63, %v69
    %v72 = vadd.f32 %v64, %v69
    %v73 = vpack.c.bf16 %v72, %v71
    %v74 = vld [vmem:[%s3] sm:$0xff]
    %v75 = vld [vmem:[%s3 + $0x8] sm:$0xff]
    %v76 = vld [vmem:[%s3 + $0x10] sm:$0xff]
    %v77 = vld [vmem:[%s3 + $0x18] sm:$0xff]
    %v82 = vunpack.c.l.b16 %v74
    %v83 = vunpack.c.h.b16 %v74
    %v84 = vunpack.c.l.b16 %v75
    %v85 = vunpack.c.h.b16 %v75
    %v86 = vunpack.c.l.b16 %v76
    %v87 = vunpack.c.h.b16 %v76
    %v88 = vunpack.c.l.b16 %v77
    %v89 = vunpack.c.h.b16 %v77
    %v90 = vpack.c.b16 %v84, %v82
    %v91 = vpack.c.b16 %v85, %v83
    %v92 = vpack.c.b16 %v88, %v86
    %v93 = vpack.c.b16 %v89, %v87
    %v99 = vsel %vm29, %v73, 0
    %101 = vmatprep.subr.bf16.mxu0 0
    %102 = vmatpush1.bf16.msra.mxu0 0
    %103 = vmatprep.subr.bf16.mxu0 0
    %104 = vmatpush1.bf16.msra.mxu0 0
    %105 = vmatprep.subr.bf16.mxu0 0
    %106 = vmatpush1.bf16.msra.mxu0 0
    %107 = vmatprep.subr.bf16.mxu0 0
    %108 = vmatpush1.bf16.msra.mxu0 0
    %109 = vmatprep.subr.bf16.mxu0 0
    %110 = vmatpush1.bf16.msra.mxu0 0
    %111 = vmatprep.subr.bf16.mxu0 0
    %112 = vmatpush1.bf16.msra.mxu0 0
    %113 = vmatprep.subr.bf16.mxu0 %v93
    %114 = vmatpush1.bf16.msra.mxu0 %v92
    %115 = vmatprep.subr.bf16.mxu0 %v91
    %116 = vmatpush1.bf16.msra.mxu0 %v90
    %117 = vmatprep.subr.bf16.mxu0 0
    %118 = vmatpush2.bf16.msra.mxu0 0
    %119 = vmatprep.subr.bf16.mxu0 0
    %120 = vmatpush2.bf16.msra.mxu0 0
    %121 = vmatprep.subr.bf16.mxu0 0
    %122 = vmatpush2.bf16.msra.mxu0 0
    %123 = vmatprep.subr.bf16.mxu0 0
    %124 = vmatpush2.bf16.msra.mxu0 0
    %125 = vmatprep.subr.bf16.mxu0 0
    %126 = vmatpush2.bf16.msra.mxu0 0
    %127 = vmatprep.subr.bf16.mxu0 0
    %128 = vmatpush2.bf16.msra.mxu0 0
    %129 = vmatprep.subr.bf16.mxu0 0
    %130 = vmatpush2.bf16.msra.mxu0 0
    %131 = vmatprep.subr.bf16.mxu0 0
    %132 = vmatpush2.bf16.msra.mxu0 0
    %133 = vmatprep.mubr.bf16.mxu0 0
    %134 = vmatmul.mubr.bf16.gmra.mxu0 %v99
    %v135 = vpop.f32.mrf.mxu0
    %v136 = vadd.f32 0.0, %v135
    %v137 = vpop.f32.mrf.mxu0
    %v138 = vadd.f32 0.0, %v137
    %v139 = vpop.f32.mrf.mxu0
    %v140 = vadd.f32 0.0, %v139
    %v141 = vpop.f32.mrf.mxu0
    %v142 = vadd.f32 0.0, %v141
    %143 = vdwg.mxu0
    %v144 = vld [vmem:[%s4] sm:$0xf]
    %v145 = vld [vmem:[%s4 + $0x4] sm:$0xf]
    %v146 = vld [vmem:[%s4 + $0x8] sm:$0xf]
    %v147 = vld [vmem:[%s4 + $0xc] sm:$0xf]
    %v148 = vld [vmem:[%s4 + $0x10] sm:$0xf]
    %v149 = vld [vmem:[%s4 + $0x14] sm:$0xf]
    %v150 = vld [vmem:[%s4 + $0x18] sm:$0xf]
    %v151 = vld [vmem:[%s4 + $0x1c] sm:$0xf]
    %v152 = vld [vmem:[%s5] sm:$0x1]
    %v154 = vlaneseq
    %v155 = vshrl.u32 %v154, 7
    %v156 = vsub.s32 0, %v155
    %v157 = vrot.slane %v152, %v156
    %v159 = vadd.f32 %v157, %v25
    %v160 = vmul.f32 %v136, 0.25
    %v161 = vpack.c.bf16 %v160, %v160
    %v162 = vpack.c.bf16 %v136, %v136
    %v163 = vpack.c.bf16 %v138, %v138
    %165 = vrot.lane.b32.xlu0 %v162, 64
    %v166 = vpop.permute.xlu0 %165
    %vm167 = vcmask 130048
    %v169 = vsel %vm167, %v161, 0
    %v172 = vsel %vm167, %v166, 0
    %174 = vmatprep.subr.bf16.mxu0 0
    %175 = vmatpush1.bf16.xpose.msra.mxu0 0
    %176 = vmatprep.subr.bf16.mxu0 0
    %177 = vmatpush1.bf16.xpose.msra.mxu0 0
    %178 = vmatprep.subr.bf16.mxu0 0
    %179 = vmatpush1.bf16.xpose.msra.mxu0 0
    %180 = vmatprep.subr.bf16.mxu0 0
    %181 = vmatpush1.bf16.xpose.msra.mxu0 0
    %182 = vmatprep.subr.bf16.mxu0 0
    %183 = vmatpush1.bf16.xpose.msra.mxu0 0
    %184 = vmatprep.subr.bf16.mxu0 0
    %185 = vmatpush1.bf16.xpose.msra.mxu0 0
    %186 = vmatprep.subr.bf16.mxu0 0
    %187 = vmatpush1.bf16.xpose.msra.mxu0 0
    %188 = vmatprep.subr.bf16.mxu0 0
    %189 = vmatpush1.bf16.xpose.msra.mxu0 %v172
    %190 = vmatprep.subr.bf16.mxu0 0
    %191 = vmatpush2.bf16.xpose.msra.mxu0 0
    %192 = vmatprep.subr.bf16.mxu0 0
    %193 = vmatpush2.bf16.xpose.msra.mxu0 0
    %194 = vmatprep.subr.bf16.mxu0 0
    %195 = vmatpush2.bf16.xpose.msra.mxu0 0
    %196 = vmatprep.subr.bf16.mxu0 0
    %197 = vmatpush2.bf16.xpose.msra.mxu0 0
    %198 = vmatprep.subr.bf16.mxu0 0
    %199 = vmatpush2.bf16.xpose.msra.mxu0 0
    %200 = vmatprep.subr.bf16.mxu0 0
    %201 = vmatpush2.bf16.xpose.msra.mxu0 0
    %202 = vmatprep.subr.bf16.mxu0 0
    %203 = vmatpush2.bf16.xpose.msra.mxu0 0
    %204 = vmatprep.subr.bf16.mxu0 0
    %205 = vmatpush2.bf16.xpose.msra.mxu0 0
    %206 = vmatprep.mubr.bf16.mxu0 0
    %207 = vmatmul.mubr.bf16.gmra.mxu0 %v169
    %v208 = vpop.f32.mrf.mxu0
    %v209 = vadd.f32 0.0, %v208
    %v210 = vpop.f32.mrf.mxu0
    %v211 = vpop.f32.mrf.mxu0
    %v212 = vpop.f32.mrf.mxu0
    %213 = vdwg.mxu0
    %vm214 = vcmask 64512
    %v215 = vsel %vm214, %v209, -inf
    %216 = vmax.xlane.f32.xlu0 %v215
    %v217 = vpop.xlane.xlu0 %216
    %v218 = vsub.f32 %v209, %v217
    %v219 = vmul.f32 %v218, 1.442695
    %v220 = vpow.pop %v219
    %v221 = vsel %vm214, %v220, 0.0
    %222 = vadd.xlane.f32.xlu0 %v221
    %v223 = vpop.xlane.xlu0 %222
    %v224 = vrcp.pop %v223
    %v225 = vmul.f32 %v220, %v224
    %v226 = vpack.c.bf16 %v225, %v225
    %v228 = vsel %vm214, %v226, 0
    %vm230 = vcmask 1043456
    %v232 = vsel %vm230, %v163, 0
    %234 = vmatprep.subr.bf16.mxu0 0
    %235 = vmatpush1.bf16.msra.mxu0 0
    %236 = vmatprep.subr.bf16.mxu0 0
    %237 = vmatpush1.bf16.msra.mxu0 0
    %238 = vmatprep.subr.bf16.mxu0 0
    %239 = vmatpush1.bf16.msra.mxu0 0
    %240 = vmatprep.subr.bf16.mxu0 0
    %241 = vmatpush1.bf16.msra.mxu0 0
    %242 = vmatprep.subr.bf16.mxu0 0
    %243 = vmatpush1.bf16.msra.mxu0 0
    %244 = vmatprep.subr.bf16.mxu0 0
    %245 = vmatpush1.bf16.msra.mxu0 0
    %246 = vmatprep.subr.bf16.mxu0 0
    %247 = vmatpush1.bf16.msra.mxu0 0
    %248 = vmatprep.subr.bf16.mxu0 0
    %249 = vmatpush1.bf16.msra.mxu0 %v232
    %250 = vmatprep.subr.bf16.mxu0 0
    %251 = vmatpush2.bf16.msra.mxu0 0
    %252 = vmatprep.subr.bf16.mxu0 0
    %253 = vmatpush2.bf16.msra.mxu0 0
    %254 = vmatprep.subr.bf16.mxu0 0
    %255 = vmatpush2.bf16.msra.mxu0 0
    %256 = vmatprep.subr.bf16.mxu0 0
    %257 = vmatpush2.bf16.msra.mxu0 0
    %258 = vmatprep.subr.bf16.mxu0 0
    %259 = vmatpush2.bf16.msra.mxu0 0
    %260 = vmatprep.subr.bf16.mxu0 0
    %261 = vmatpush2.bf16.msra.mxu0 0
    %262 = vmatprep.subr.bf16.mxu0 0
    %263 = vmatpush2.bf16.msra.mxu0 0
    %264 = vmatprep.subr.bf16.mxu0 0
    %265 = vmatpush2.bf16.msra.mxu0 0
    %266 = vmatprep.mubr.bf16.mxu0 0
    %267 = vmatmul.mubr.bf16.gmra.mxu0 %v228
    %v268 = vpop.f32.mrf.mxu0
    %v269 = vadd.f32 0.0, %v268
    %v270 = vpop.f32.mrf.mxu0
    %v271 = vpop.f32.mrf.mxu0
    %v272 = vpop.f32.mrf.mxu0
    %273 = vdwg.mxu0
    %v274 = vpack.c.bf16 %v269, %v269
    %v277 = vunpack.c.l.b16 %v144
    %v278 = vunpack.c.l.b16 %v145
    %v279 = vpack.c.b16 %v278, %v277
    %v282 = vsel %vm167, %v274, 0
    %284 = vmatprep.subr.bf16.mxu0 0
    %285 = vmatpush1.bf16.msra.mxu0 0
    %286 = vmatprep.subr.bf16.mxu0 0
    %287 = vmatpush1.bf16.msra.mxu0 0
    %288 = vmatprep.subr.bf16.mxu0 0
    %289 = vmatpush1.bf16.msra.mxu0 0
    %290 = vmatprep.subr.bf16.mxu0 0
    %291 = vmatpush1.bf16.msra.mxu0 0
    %292 = vmatprep.subr.bf16.mxu0 0
    %293 = vmatpush1.bf16.msra.mxu0 0
    %294 = vmatprep.subr.bf16.mxu0 0
    %295 = vmatpush1.bf16.msra.mxu0 0
    %296 = vmatprep.subr.bf16.mxu0 0
    %297 = vmatpush1.bf16.msra.mxu0 0
    %298 = vmatprep.subr.bf16.mxu0 0
    %299 = vmatpush1.bf16.msra.mxu0 %v279
    %300 = vmatprep.subr.bf16.mxu0 0
    %301 = vmatpush2.bf16.msra.mxu0 0
    %302 = vmatprep.subr.bf16.mxu0 0
    %303 = vmatpush2.bf16.msra.mxu0 0
    %304 = vmatprep.subr.bf16.mxu0 0
    %305 = vmatpush2.bf16.msra.mxu0 0
    %306 = vmatprep.subr.bf16.mxu0 0
    %307 = vmatpush2.bf16.msra.mxu0 0
    %308 = vmatprep.subr.bf16.mxu0 0
    %309 = vmatpush2.bf16.msra.mxu0 0
    %310 = vmatprep.subr.bf16.mxu0 0
    %311 = vmatpush2.bf16.msra.mxu0 0
    %312 = vmatprep.subr.bf16.mxu0 0
    %313 = vmatpush2.bf16.msra.mxu0 0
    %314 = vmatprep.subr.bf16.mxu0 0
    %315 = vmatpush2.bf16.msra.mxu0 0
    %316 = vmatprep.mubr.bf16.mxu0 0
    %317 = vmatmul.mubr.bf16.gmra.mxu0 %v282
    %v318 = vpop.f32.mrf.mxu0
    %v319 = vadd.f32 0.0, %v318
    %v320 = vpop.f32.mrf.mxu0
    %v321 = vpop.f32.mrf.mxu0
    %v322 = vpop.f32.mrf.mxu0
    %323 = vdwg.mxu0
    %v324 = vadd.f32 %v159, %v319
    %326 = vrot.lane.b32.xlu0 %v161, 112
    %v327 = vpop.permute.xlu0 %326
    %328 = vrot.lane.b32.xlu0 %v162, 48
    %v329 = vpop.permute.xlu0 %328
    %v331 = vsel %vm167, %v327, 0
    %v334 = vsel %vm167, %v329, 0
    %336 = vmatprep.subr.bf16.mxu0 0
    %337 = vmatpush1.bf16.xpose.msra.mxu0 0
    %338 = vmatprep.subr.bf16.mxu0 0
    %339 = vmatpush1.bf16.xpose.msra.mxu0 0
    %340 = vmatprep.subr.bf16.mxu0 0
    %341 = vmatpush1.bf16.xpose.msra.mxu0 0
    %342 = vmatprep.subr.bf16.mxu0 0
    %343 = vmatpush1.bf16.xpose.msra.mxu0 0
    %344 = vmatprep.subr.bf16.mxu0 0
    %345 = vmatpush1.bf16.xpose.msra.mxu0 0
    %346 = vmatprep.subr.bf16.mxu0 0
    %347 = vmatpush1.bf16.xpose.msra.mxu0 0
    %348 = vmatprep.subr.bf16.mxu0 0
    %349 = vmatpush1.bf16.xpose.msra.mxu0 0
    %350 = vmatprep.subr.bf16.mxu0 0
    %351 = vmatpush1.bf16.xpose.msra.mxu0 %v334
    %352 = vmatprep.subr.bf16.mxu0 0
    %353 = vmatpush2.bf16.xpose.msra.mxu0 0
    %354 = vmatprep.subr.bf16.mxu0 0
    %355 = vmatpush2.bf16.xpose.msra.mxu0 0
    %356 = vmatprep.subr.bf16.mxu0 0
    %357 = vmatpush2.bf16.xpose.msra.mxu0 0
    %358 = vmatprep.subr.bf16.mxu0 0
    %359 = vmatpush2.bf16.xpose.msra.mxu0 0
    %360 = vmatprep.subr.bf16.mxu0 0
    %361 = vmatpush2.bf16.xpose.msra.mxu0 0
    %362 = vmatprep.subr.bf16.mxu0 0
    %363 = vmatpush2.bf16.xpose.msra.mxu0 0
    %364 = vmatprep.subr.bf16.mxu0 0
    %365 = vmatpush2.bf16.xpose.msra.mxu0 0
    %366 = vmatprep.subr.bf16.mxu0 0
    %367 = vmatpush2.bf16.xpose.msra.mxu0 0
    %368 = vmatprep.mubr.bf16.mxu0 0
    %369 = vmatmul.mubr.bf16.gmra.mxu0 %v331
    %v370 = vpop.f32.mrf.mxu0
    %v371 = vadd.f32 0.0, %v370
    %v372 = vpop.f32.mrf.mxu0
    %v373 = vpop.f32.mrf.mxu0
    %v374 = vpop.f32.mrf.mxu0
    %375 = vdwg.mxu0
    %v376 = vsel %vm214, %v371, -inf
    %377 = vmax.xlane.f32.xlu0 %v376
    %v378 = vpop.xlane.xlu0 %377
    %v379 = vsub.f32 %v371, %v378
    %v380 = vmul.f32 %v379, 1.442695
    %v381 = vpow.pop %v380
    %v382 = vsel %vm214, %v381, 0.0
    %383 = vadd.xlane.f32.xlu0 %v382
    %v384 = vpop.xlane.xlu0 %383
    %v385 = vrcp.pop %v384
    %v386 = vmul.f32 %v381, %v385
    %v387 = vpack.c.bf16 %v386, %v386
    %389 = vrot.lane.b32.xlu0 %v163, 112
    %v390 = vpop.permute.xlu0 %389
    %v392 = vsel %vm214, %v387, 0
    %v395 = vsel %vm230, %v390, 0
    %397 = vmatprep.subr.bf16.mxu0 0
    %398 = vmatpush1.bf16.msra.mxu0 0
    %399 = vmatprep.subr.bf16.mxu0 0
    %400 = vmatpush1.bf16.msra.mxu0 0
    %401 = vmatprep.subr.bf16.mxu0 0
    %402 = vmatpush1.bf16.msra.mxu0 0
    %403 = vmatprep.subr.bf16.mxu0 0
    %404 = vmatpush1.bf16.msra.mxu0 0
    %405 = vmatprep.subr.bf16.mxu0 0
    %406 = vmatpush1.bf16.msra.mxu0 0
    %407 = vmatprep.subr.bf16.mxu0 0
    %408 = vmatpush1.bf16.msra.mxu0 0
    %409 = vmatprep.subr.bf16.mxu0 0
    %410 = vmatpush1.bf16.msra.mxu0 0
    %411 = vmatprep.subr.bf16.mxu0 0
    %412 = vmatpush1.bf16.msra.mxu0 %v395
    %413 = vmatprep.subr.bf16.mxu0 0
    %414 = vmatpush2.bf16.msra.mxu0 0
    %415 = vmatprep.subr.bf16.mxu0 0
    %416 = vmatpush2.bf16.msra.mxu0 0
    %417 = vmatprep.subr.bf16.mxu0 0
    %418 = vmatpush2.bf16.msra.mxu0 0
    %419 = vmatprep.subr.bf16.mxu0 0
    %420 = vmatpush2.bf16.msra.mxu0 0
    %421 = vmatprep.subr.bf16.mxu0 0
    %422 = vmatpush2.bf16.msra.mxu0 0
    %423 = vmatprep.subr.bf16.mxu0 0
    %424 = vmatpush2.bf16.msra.mxu0 0
    %425 = vmatprep.subr.bf16.mxu0 0
    %426 = vmatpush2.bf16.msra.mxu0 0
    %427 = vmatprep.subr.bf16.mxu0 0
    %428 = vmatpush2.bf16.msra.mxu0 0
    %429 = vmatprep.mubr.bf16.mxu0 0
    %430 = vmatmul.mubr.bf16.gmra.mxu0 %v392
    %v431 = vpop.f32.mrf.mxu0
    %v432 = vadd.f32 0.0, %v431
    %v433 = vpop.f32.mrf.mxu0
    %v434 = vpop.f32.mrf.mxu0
    %v435 = vpop.f32.mrf.mxu0
    %436 = vdwg.mxu0
    %v437 = vpack.c.bf16 %v432, %v432
    %v440 = vunpack.c.l.b16 %v146
    %v441 = vunpack.c.l.b16 %v147
    %v442 = vpack.c.b16 %v441, %v440
    %v445 = vsel %vm167, %v437, 0
    %447 = vmatprep.subr.bf16.mxu0 0
    %448 = vmatpush1.bf16.msra.mxu0 0
    %449 = vmatprep.subr.bf16.mxu0 0
    %450 = vmatpush1.bf16.msra.mxu0 0
    %451 = vmatprep.subr.bf16.mxu0 0
    %452 = vmatpush1.bf16.msra.mxu0 0
    %453 = vmatprep.subr.bf16.mxu0 0
    %454 = vmatpush1.bf16.msra.mxu0 0
    %455 = vmatprep.subr.bf16.mxu0 0
    %456 = vmatpush1.bf16.msra.mxu0 0
    %457 = vmatprep.subr.bf16.mxu0 0
    %458 = vmatpush1.bf16.msra.mxu0 0
    %459 = vmatprep.subr.bf16.mxu0 0
    %460 = vmatpush1.bf16.msra.mxu0 0
    %461 = vmatprep.subr.bf16.mxu0 0
    %462 = vmatpush1.bf16.msra.mxu0 %v442
    %463 = vmatprep.subr.bf16.mxu0 0
    %464 = vmatpush2.bf16.msra.mxu0 0
    %465 = vmatprep.subr.bf16.mxu0 0
    %466 = vmatpush2.bf16.msra.mxu0 0
    %467 = vmatprep.subr.bf16.mxu0 0
    %468 = vmatpush2.bf16.msra.mxu0 0
    %469 = vmatprep.subr.bf16.mxu0 0
    %470 = vmatpush2.bf16.msra.mxu0 0
    %471 = vmatprep.subr.bf16.mxu0 0
    %472 = vmatpush2.bf16.msra.mxu0 0
    %473 = vmatprep.subr.bf16.mxu0 0
    %474 = vmatpush2.bf16.msra.mxu0 0
    %475 = vmatprep.subr.bf16.mxu0 0
    %476 = vmatpush2.bf16.msra.mxu0 0
    %477 = vmatprep.subr.bf16.mxu0 0
    %478 = vmatpush2.bf16.msra.mxu0 0
    %479 = vmatprep.mubr.bf16.mxu0 0
    %480 = vmatmul.mubr.bf16.gmra.mxu0 %v445
    %v481 = vpop.f32.mrf.mxu0
    %v482 = vadd.f32 0.0, %v481
    %v483 = vpop.f32.mrf.mxu0
    %v484 = vpop.f32.mrf.mxu0
    %v485 = vpop.f32.mrf.mxu0
    %486 = vdwg.mxu0
    %v487 = vadd.f32 %v324, %v482
    %488 = vrot.lane.b32.xlu0 %v161, 96
    %v489 = vpop.permute.xlu0 %488
    %490 = vrot.lane.b32.xlu0 %v162, 32
    %v491 = vpop.permute.xlu0 %490
    %v493 = vsel %vm167, %v489, 0
    %v496 = vsel %vm167, %v491, 0
    %498 = vmatprep.subr.bf16.mxu0 0
    %499 = vmatpush1.bf16.xpose.msra.mxu0 0
    %500 = vmatprep.subr.bf16.mxu0 0
    %501 = vmatpush1.bf16.xpose.msra.mxu0 0
    %502 = vmatprep.subr.bf16.mxu0 0
    %503 = vmatpush1.bf16.xpose.msra.mxu0 0
    %504 = vmatprep.subr.bf16.mxu0 0
    %505 = vmatpush1.bf16.xpose.msra.mxu0 0
    %506 = vmatprep.subr.bf16.mxu0 0
    %507 = vmatpush1.bf16.xpose.msra.mxu0 0
    %508 = vmatprep.subr.bf16.mxu0 0
    %509 = vmatpush1.bf16.xpose.msra.mxu0 0
    %510 = vmatprep.subr.bf16.mxu0 0
    %511 = vmatpush1.bf16.xpose.msra.mxu0 0
    %512 = vmatprep.subr.bf16.mxu0 0
    %513 = vmatpush1.bf16.xpose.msra.mxu0 %v496
    %514 = vmatprep.subr.bf16.mxu0 0
    %515 = vmatpush2.bf16.xpose.msra.mxu0 0
    %516 = vmatprep.subr.bf16.mxu0 0
    %517 = vmatpush2.bf16.xpose.msra.mxu0 0
    %518 = vmatprep.subr.bf16.mxu0 0
    %519 = vmatpush2.bf16.xpose.msra.mxu0 0
    %520 = vmatprep.subr.bf16.mxu0 0
    %521 = vmatpush2.bf16.xpose.msra.mxu0 0
    %522 = vmatprep.subr.bf16.mxu0 0
    %523 = vmatpush2.bf16.xpose.msra.mxu0 0
    %524 = vmatprep.subr.bf16.mxu0 0
    %525 = vmatpush2.bf16.xpose.msra.mxu0 0
    %526 = vmatprep.subr.bf16.mxu0 0
    %527 = vmatpush2.bf16.xpose.msra.mxu0 0
    %528 = vmatprep.subr.bf16.mxu0 0
    %529 = vmatpush2.bf16.xpose.msra.mxu0 0
    %530 = vmatprep.mubr.bf16.mxu0 0
    %531 = vmatmul.mubr.bf16.gmra.mxu0 %v493
    %v532 = vpop.f32.mrf.mxu0
    %v533 = vadd.f32 0.0, %v532
    %v534 = vpop.f32.mrf.mxu0
    %v535 = vpop.f32.mrf.mxu0
    %v536 = vpop.f32.mrf.mxu0
    %537 = vdwg.mxu0
    %v538 = vsel %vm214, %v533, -inf
    %539 = vmax.xlane.f32.xlu0 %v538
    %v540 = vpop.xlane.xlu0 %539
    %v541 = vsub.f32 %v533, %v540
    %v542 = vmul.f32 %v541, 1.442695
    %v543 = vpow.pop %v542
    %v544 = vsel %vm214, %v543, 0.0
    %545 = vadd.xlane.f32.xlu0 %v544
    %v546 = vpop.xlane.xlu0 %545
    %v547 = vrcp.pop %v546
    %v548 = vmul.f32 %v543, %v547
    %v549 = vpack.c.bf16 %v548, %v548
    %550 = vrot.lane.b32.xlu0 %v163, 96
    %v551 = vpop.permute.xlu0 %550
    %v553 = vsel %vm214, %v549, 0
    %v556 = vsel %vm230, %v551, 0
    %558 = vmatprep.subr.bf16.mxu0 0
    %559 = vmatpush1.bf16.msra.mxu0 0
    %560 = vmatprep.subr.bf16.mxu0 0
    %561 = vmatpush1.bf16.msra.mxu0 0
    %562 = vmatprep.subr.bf16.mxu0 0
    %563 = vmatpush1.bf16.msra.mxu0 0
    %564 = vmatprep.subr.bf16.mxu0 0
    %565 = vmatpush1.bf16.msra.mxu0 0
    %566 = vmatprep.subr.bf16.mxu0 0
    %567 = vmatpush1.bf16.msra.mxu0 0
    %568 = vmatprep.subr.bf16.mxu0 0
    %569 = vmatpush1.bf16.msra.mxu0 0
    %570 = vmatprep.subr.bf16.mxu0 0
    %571 = vmatpush1.bf16.msra.mxu0 0
    %572 = vmatprep.subr.bf16.mxu0 0
    %573 = vmatpush1.bf16.msra.mxu0 %v556
    %574 = vmatprep.subr.bf16.mxu0 0
    %575 = vmatpush2.bf16.msra.mxu0 0
    %576 = vmatprep.subr.bf16.mxu0 0
    %577 = vmatpush2.bf16.msra.mxu0 0
    %578 = vmatprep.subr.bf16.mxu0 0
    %579 = vmatpush2.bf16.msra.mxu0 0
    %580 = vmatprep.subr.bf16.mxu0 0
    %581 = vmatpush2.bf16.msra.mxu0 0
    %582 = vmatprep.subr.bf16.mxu0 0
    %583 = vmatpush2.bf16.msra.mxu0 0
    %584 = vmatprep.subr.bf16.mxu0 0
    %585 = vmatpush2.bf16.msra.mxu0 0
    %586 = vmatprep.subr.bf16.mxu0 0
    %587 = vmatpush2.bf16.msra.mxu0 0
    %588 = vmatprep.subr.bf16.mxu0 0
    %589 = vmatpush2.bf16.msra.mxu0 0
    %590 = vmatprep.mubr.bf16.mxu0 0
    %591 = vmatmul.mubr.bf16.gmra.mxu0 %v553
    %v592 = vpop.f32.mrf.mxu0
    %v593 = vadd.f32 0.0, %v592
    %v594 = vpop.f32.mrf.mxu0
    %v595 = vpop.f32.mrf.mxu0
    %v596 = vpop.f32.mrf.mxu0
    %597 = vdwg.mxu0
    %v598 = vpack.c.bf16 %v593, %v593
    %v601 = vunpack.c.l.b16 %v148
    %v602 = vunpack.c.l.b16 %v149
    %v603 = vpack.c.b16 %v602, %v601
    %v606 = vsel %vm167, %v598, 0
    %608 = vmatprep.subr.bf16.mxu0 0
    %609 = vmatpush1.bf16.msra.mxu0 0
    %610 = vmatprep.subr.bf16.mxu0 0
    %611 = vmatpush1.bf16.msra.mxu0 0
    %612 = vmatprep.subr.bf16.mxu0 0
    %613 = vmatpush1.bf16.msra.mxu0 0
    %614 = vmatprep.subr.bf16.mxu0 0
    %615 = vmatpush1.bf16.msra.mxu0 0
    %616 = vmatprep.subr.bf16.mxu0 0
    %617 = vmatpush1.bf16.msra.mxu0 0
    %618 = vmatprep.subr.bf16.mxu0 0
    %619 = vmatpush1.bf16.msra.mxu0 0
    %620 = vmatprep.subr.bf16.mxu0 0
    %621 = vmatpush1.bf16.msra.mxu0 0
    %622 = vmatprep.subr.bf16.mxu0 0
    %623 = vmatpush1.bf16.msra.mxu0 %v603
    %624 = vmatprep.subr.bf16.mxu0 0
    %625 = vmatpush2.bf16.msra.mxu0 0
    %626 = vmatprep.subr.bf16.mxu0 0
    %627 = vmatpush2.bf16.msra.mxu0 0
    %628 = vmatprep.subr.bf16.mxu0 0
    %629 = vmatpush2.bf16.msra.mxu0 0
    %630 = vmatprep.subr.bf16.mxu0 0
    %631 = vmatpush2.bf16.msra.mxu0 0
    %632 = vmatprep.subr.bf16.mxu0 0
    %633 = vmatpush2.bf16.msra.mxu0 0
    %634 = vmatprep.subr.bf16.mxu0 0
    %635 = vmatpush2.bf16.msra.mxu0 0
    %636 = vmatprep.subr.bf16.mxu0 0
    %637 = vmatpush2.bf16.msra.mxu0 0
    %638 = vmatprep.subr.bf16.mxu0 0
    %639 = vmatpush2.bf16.msra.mxu0 0
    %640 = vmatprep.mubr.bf16.mxu0 0
    %641 = vmatmul.mubr.bf16.gmra.mxu0 %v606
    %v642 = vpop.f32.mrf.mxu0
    %v643 = vadd.f32 0.0, %v642
    %v644 = vpop.f32.mrf.mxu0
    %v645 = vpop.f32.mrf.mxu0
    %v646 = vpop.f32.mrf.mxu0
    %647 = vdwg.mxu0
    %v648 = vadd.f32 %v487, %v643
    %649 = vrot.lane.b32.xlu0 %v161, 80
    %v650 = vpop.permute.xlu0 %649
    %651 = vrot.lane.b32.xlu0 %v162, 16
    %v652 = vpop.permute.xlu0 %651
    %v654 = vsel %vm167, %v650, 0
    %v657 = vsel %vm167, %v652, 0
    %659 = vmatprep.subr.bf16.mxu0 0
    %660 = vmatpush1.bf16.xpose.msra.mxu0 0
    %661 = vmatprep.subr.bf16.mxu0 0
    %662 = vmatpush1.bf16.xpose.msra.mxu0 0
    %663 = vmatprep.subr.bf16.mxu0 0
    %664 = vmatpush1.bf16.xpose.msra.mxu0 0
    %665 = vmatprep.subr.bf16.mxu0 0
    %666 = vmatpush1.bf16.xpose.msra.mxu0 0
    %667 = vmatprep.subr.bf16.mxu0 0
    %668 = vmatpush1.bf16.xpose.msra.mxu0 0
    %669 = vmatprep.subr.bf16.mxu0 0
    %670 = vmatpush1.bf16.xpose.msra.mxu0 0
    %671 = vmatprep.subr.bf16.mxu0 0
    %672 = vmatpush1.bf16.xpose.msra.mxu0 0
    %673 = vmatprep.subr.bf16.mxu0 0
    %674 = vmatpush1.bf16.xpose.msra.mxu0 %v657
    %675 = vmatprep.subr.bf16.mxu0 0
    %676 = vmatpush2.bf16.xpose.msra.mxu0 0
    %677 = vmatprep.subr.bf16.mxu0 0
    %678 = vmatpush2.bf16.xpose.msra.mxu0 0
    %679 = vmatprep.subr.bf16.mxu0 0
    %680 = vmatpush2.bf16.xpose.msra.mxu0 0
    %681 = vmatprep.subr.bf16.mxu0 0
    %682 = vmatpush2.bf16.xpose.msra.mxu0 0
    %683 = vmatprep.subr.bf16.mxu0 0
    %684 = vmatpush2.bf16.xpose.msra.mxu0 0
    %685 = vmatprep.subr.bf16.mxu0 0
    %686 = vmatpush2.bf16.xpose.msra.mxu0 0
    %687 = vmatprep.subr.bf16.mxu0 0
    %688 = vmatpush2.bf16.xpose.msra.mxu0 0
    %689 = vmatprep.subr.bf16.mxu0 0
    %690 = vmatpush2.bf16.xpose.msra.mxu0 0
    %691 = vmatprep.mubr.bf16.mxu0 0
    %692 = vmatmul.mubr.bf16.gmra.mxu0 %v654
    %v693 = vpop.f32.mrf.mxu0
    %v694 = vadd.f32 0.0, %v693
    %v695 = vpop.f32.mrf.mxu0
    %v696 = vpop.f32.mrf.mxu0
    %v697 = vpop.f32.mrf.mxu0
    %698 = vdwg.mxu0
    %v699 = vsel %vm214, %v694, -inf
    %700 = vmax.xlane.f32.xlu0 %v699
    %v701 = vpop.xlane.xlu0 %700
    %v702 = vsub.f32 %v694, %v701
    %v703 = vmul.f32 %v702, 1.442695
    %v704 = vpow.pop %v703
    %v705 = vsel %vm214, %v704, 0.0
    %706 = vadd.xlane.f32.xlu0 %v705
    %v707 = vpop.xlane.xlu0 %706
    %v708 = vrcp.pop %v707
    %v709 = vmul.f32 %v704, %v708
    %v710 = vpack.c.bf16 %v709, %v709
    %711 = vrot.lane.b32.xlu0 %v163, 80
    %v712 = vpop.permute.xlu0 %711
    %v714 = vsel %vm214, %v710, 0
    %v717 = vsel %vm230, %v712, 0
    %719 = vmatprep.subr.bf16.mxu0 0
    %720 = vmatpush1.bf16.msra.mxu0 0
    %721 = vmatprep.subr.bf16.mxu0 0
    %722 = vmatpush1.bf16.msra.mxu0 0
    %723 = vmatprep.subr.bf16.mxu0 0
    %724 = vmatpush1.bf16.msra.mxu0 0
    %725 = vmatprep.subr.bf16.mxu0 0
    %726 = vmatpush1.bf16.msra.mxu0 0
    %727 = vmatprep.subr.bf16.mxu0 0
    %728 = vmatpush1.bf16.msra.mxu0 0
    %729 = vmatprep.subr.bf16.mxu0 0
    %730 = vmatpush1.bf16.msra.mxu0 0
    %731 = vmatprep.subr.bf16.mxu0 0
    %732 = vmatpush1.bf16.msra.mxu0 0
    %733 = vmatprep.subr.bf16.mxu0 0
    %734 = vmatpush1.bf16.msra.mxu0 %v717
    %735 = vmatprep.subr.bf16.mxu0 0
    %736 = vmatpush2.bf16.msra.mxu0 0
    %737 = vmatprep.subr.bf16.mxu0 0
    %738 = vmatpush2.bf16.msra.mxu0 0
    %739 = vmatprep.subr.bf16.mxu0 0
    %740 = vmatpush2.bf16.msra.mxu0 0
    %741 = vmatprep.subr.bf16.mxu0 0
    %742 = vmatpush2.bf16.msra.mxu0 0
    %743 = vmatprep.subr.bf16.mxu0 0
    %744 = vmatpush2.bf16.msra.mxu0 0
    %745 = vmatprep.subr.bf16.mxu0 0
    %746 = vmatpush2.bf16.msra.mxu0 0
    %747 = vmatprep.subr.bf16.mxu0 0
    %748 = vmatpush2.bf16.msra.mxu0 0
    %749 = vmatprep.subr.bf16.mxu0 0
    %750 = vmatpush2.bf16.msra.mxu0 0
    %751 = vmatprep.mubr.bf16.mxu0 0
    %752 = vmatmul.mubr.bf16.gmra.mxu0 %v714
    %v753 = vpop.f32.mrf.mxu0
    %v754 = vadd.f32 0.0, %v753
    %v755 = vpop.f32.mrf.mxu0
    %v756 = vpop.f32.mrf.mxu0
    %v757 = vpop.f32.mrf.mxu0
    %758 = vdwg.mxu0
    %v759 = vpack.c.bf16 %v754, %v754
    %v762 = vunpack.c.l.b16 %v150
    %v763 = vunpack.c.l.b16 %v151
    %v764 = vpack.c.b16 %v763, %v762
    %v767 = vsel %vm167, %v759, 0
    %769 = vmatprep.subr.bf16.mxu0 0
    %770 = vmatpush1.bf16.msra.mxu0 0
    %771 = vmatprep.subr.bf16.mxu0 0
    %772 = vmatpush1.bf16.msra.mxu0 0
    %773 = vmatprep.subr.bf16.mxu0 0
    %774 = vmatpush1.bf16.msra.mxu0 0
    %775 = vmatprep.subr.bf16.mxu0 0
    %776 = vmatpush1.bf16.msra.mxu0 0
    %777 = vmatprep.subr.bf16.mxu0 0
    %778 = vmatpush1.bf16.msra.mxu0 0
    %779 = vmatprep.subr.bf16.mxu0 0
    %780 = vmatpush1.bf16.msra.mxu0 0
    %781 = vmatprep.subr.bf16.mxu0 0
    %782 = vmatpush1.bf16.msra.mxu0 0
    %783 = vmatprep.subr.bf16.mxu0 0
    %784 = vmatpush1.bf16.msra.mxu0 %v764
    %785 = vmatprep.subr.bf16.mxu0 0
    %786 = vmatpush2.bf16.msra.mxu0 0
    %787 = vmatprep.subr.bf16.mxu0 0
    %788 = vmatpush2.bf16.msra.mxu0 0
    %789 = vmatprep.subr.bf16.mxu0 0
    %790 = vmatpush2.bf16.msra.mxu0 0
    %791 = vmatprep.subr.bf16.mxu0 0
    %792 = vmatpush2.bf16.msra.mxu0 0
    %793 = vmatprep.subr.bf16.mxu0 0
    %794 = vmatpush2.bf16.msra.mxu0 0
    %795 = vmatprep.subr.bf16.mxu0 0
    %796 = vmatpush2.bf16.msra.mxu0 0
    %797 = vmatprep.subr.bf16.mxu0 0
    %798 = vmatpush2.bf16.msra.mxu0 0
    %799 = vmatprep.subr.bf16.mxu0 0
    %800 = vmatpush2.bf16.msra.mxu0 0
    %801 = vmatprep.mubr.bf16.mxu0 0
    %802 = vmatmul.mubr.bf16.gmra.mxu0 %v767
    %v803 = vpop.f32.mrf.mxu0
    %v804 = vadd.f32 0.0, %v803
    %v805 = vpop.f32.mrf.mxu0
    %v806 = vpop.f32.mrf.mxu0
    %v807 = vpop.f32.mrf.mxu0
    %808 = vdwg.mxu0
    %v809 = vadd.f32 %v648, %v804
    %810 = vst.msk [vmem:[#allocation2] sm:$0xff] %vm29, %v809
    %v811 = vadd.f32 %v157, %v26
    %v812 = vmul.f32 %v140, 0.25
    %v813 = vpack.c.bf16 %v812, %v812
    %v814 = vpack.c.bf16 %v140, %v140
    %v815 = vpack.c.bf16 %v142, %v142
    %817 = vrot.lane.b32.xlu0 %v814, 64
    %v818 = vpop.permute.xlu0 %817
    %v820 = vsel %vm167, %v813, 0
    %v823 = vsel %vm167, %v818, 0
    %825 = vmatprep.subr.bf16.mxu0 0
    %826 = vmatpush1.bf16.xpose.msra.mxu0 0
    %827 = vmatprep.subr.bf16.mxu0 0
    %828 = vmatpush1.bf16.xpose.msra.mxu0 0
    %829 = vmatprep.subr.bf16.mxu0 0
    %830 = vmatpush1.bf16.xpose.msra.mxu0 0
    %831 = vmatprep.subr.bf16.mxu0 0
    %832 = vmatpush1.bf16.xpose.msra.mxu0 0
    %833 = vmatprep.subr.bf16.mxu0 0
    %834 = vmatpush1.bf16.xpose.msra.mxu0 0
    %835 = vmatprep.subr.bf16.mxu0 0
    %836 = vmatpush1.bf16.xpose.msra.mxu0 0
    %837 = vmatprep.subr.bf16.mxu0 0
    %838 = vmatpush1.bf16.xpose.msra.mxu0 0
    %839 = vmatprep.subr.bf16.mxu0 0
    %840 = vmatpush1.bf16.xpose.msra.mxu0 %v823
    %841 = vmatprep.subr.bf16.mxu0 0
    %842 = vmatpush2.bf16.xpose.msra.mxu0 0
    %843 = vmatprep.subr.bf16.mxu0 0
    %844 = vmatpush2.bf16.xpose.msra.mxu0 0
    %845 = vmatprep.subr.bf16.mxu0 0
    %846 = vmatpush2.bf16.xpose.msra.mxu0 0
    %847 = vmatprep.subr.bf16.mxu0 0
    %848 = vmatpush2.bf16.xpose.msra.mxu0 0
    %849 = vmatprep.subr.bf16.mxu0 0
    %850 = vmatpush2.bf16.xpose.msra.mxu0 0
    %851 = vmatprep.subr.bf16.mxu0 0
    %852 = vmatpush2.bf16.xpose.msra.mxu0 0
    %853 = vmatprep.subr.bf16.mxu0 0
    %854 = vmatpush2.bf16.xpose.msra.mxu0 0
    %855 = vmatprep.subr.bf16.mxu0 0
    %856 = vmatpush2.bf16.xpose.msra.mxu0 0
    %857 = vmatprep.mubr.bf16.mxu0 0
    %858 = vmatmul.mubr.bf16.gmra.mxu0 %v820
    %v859 = vpop.f32.mrf.mxu0
    %v860 = vadd.f32 0.0, %v859
    %v861 = vpop.f32.mrf.mxu0
    %v862 = vpop.f32.mrf.mxu0
    %v863 = vpop.f32.mrf.mxu0
    %864 = vdwg.mxu0
    %v865 = vsel %vm214, %v860, -inf
    %866 = vmax.xlane.f32.xlu0 %v865
    %v867 = vpop.xlane.xlu0 %866
    %v868 = vsub.f32 %v860, %v867
    %v869 = vmul.f32 %v868, 1.442695
    %v870 = vpow.pop %v869
    %v871 = vsel %vm214, %v870, 0.0
    %872 = vadd.xlane.f32.xlu0 %v871
    %v873 = vpop.xlane.xlu0 %872
    %v874 = vrcp.pop %v873
    %v875 = vmul.f32 %v870, %v874
    %v876 = vpack.c.bf16 %v875, %v875
    %v878 = vsel %vm214, %v876, 0
    %v881 = vsel %vm230, %v815, 0
    %883 = vmatprep.subr.bf16.mxu0 0
    %884 = vmatpush1.bf16.msra.mxu0 0
    %885 = vmatprep.subr.bf16.mxu0 0
    %886 = vmatpush1.bf16.msra.mxu0 0
    %887 = vmatprep.subr.bf16.mxu0 0
    %888 = vmatpush1.bf16.msra.mxu0 0
    %889 = vmatprep.subr.bf16.mxu0 0
    %890 = vmatpush1.bf16.msra.mxu0 0
    %891 = vmatprep.subr.bf16.mxu0 0
    %892 = vmatpush1.bf16.msra.mxu0 0
    %893 = vmatprep.subr.bf16.mxu0 0
    %894 = vmatpush1.bf16.msra.mxu0 0
    %895 = vmatprep.subr.bf16.mxu0 0
    %896 = vmatpush1.bf16.msra.mxu0 0
    %897 = vmatprep.subr.bf16.mxu0 0
    %898 = vmatpush1.bf16.msra.mxu0 %v881
    %899 = vmatprep.subr.bf16.mxu0 0
    %900 = vmatpush2.bf16.msra.mxu0 0
    %901 = vmatprep.subr.bf16.mxu0 0
    %902 = vmatpush2.bf16.msra.mxu0 0
    %903 = vmatprep.subr.bf16.mxu0 0
    %904 = vmatpush2.bf16.msra.mxu0 0
    %905 = vmatprep.subr.bf16.mxu0 0
    %906 = vmatpush2.bf16.msra.mxu0 0
    %907 = vmatprep.subr.bf16.mxu0 0
    %908 = vmatpush2.bf16.msra.mxu0 0
    %909 = vmatprep.subr.bf16.mxu0 0
    %910 = vmatpush2.bf16.msra.mxu0 0
    %911 = vmatprep.subr.bf16.mxu0 0
    %912 = vmatpush2.bf16.msra.mxu0 0
    %913 = vmatprep.subr.bf16.mxu0 0
    %914 = vmatpush2.bf16.msra.mxu0 0
    %915 = vmatprep.mubr.bf16.mxu0 0
    %916 = vmatmul.mubr.bf16.gmra.mxu0 %v878
    %v917 = vpop.f32.mrf.mxu0
    %v918 = vadd.f32 0.0, %v917
    %v919 = vpop.f32.mrf.mxu0
    %v920 = vpop.f32.mrf.mxu0
    %v921 = vpop.f32.mrf.mxu0
    %922 = vdwg.mxu0
    %v923 = vpack.c.bf16 %v918, %v918
    %v925 = vsel %vm167, %v923, 0
    %927 = vmatprep.subr.bf16.mxu0 0
    %928 = vmatpush1.bf16.msra.mxu0 0
    %929 = vmatprep.subr.bf16.mxu0 0
    %930 = vmatpush1.bf16.msra.mxu0 0
    %931 = vmatprep.subr.bf16.mxu0 0
    %932 = vmatpush1.bf16.msra.mxu0 0
    %933 = vmatprep.subr.bf16.mxu0 0
    %934 = vmatpush1.bf16.msra.mxu0 0
    %935 = vmatprep.subr.bf16.mxu0 0
    %936 = vmatpush1.bf16.msra.mxu0 0
    %937 = vmatprep.subr.bf16.mxu0 0
    %938 = vmatpush1.bf16.msra.mxu0 0
    %939 = vmatprep.subr.bf16.mxu0 0
    %940 = vmatpush1.bf16.msra.mxu0 0
    %941 = vmatprep.subr.bf16.mxu0 0
    %942 = vmatpush1.bf16.msra.mxu0 %v279
    %943 = vmatprep.subr.bf16.mxu0 0
    %944 = vmatpush2.bf16.msra.mxu0 0
    %945 = vmatprep.subr.bf16.mxu0 0
    %946 = vmatpush2.bf16.msra.mxu0 0
    %947 = vmatprep.subr.bf16.mxu0 0
    %948 = vmatpush2.bf16.msra.mxu0 0
    %949 = vmatprep.subr.bf16.mxu0 0
    %950 = vmatpush2.bf16.msra.mxu0 0
    %951 = vmatprep.subr.bf16.mxu0 0
    %952 = vmatpush2.bf16.msra.mxu0 0
    %953 = vmatprep.subr.bf16.mxu0 0
    %954 = vmatpush2.bf16.msra.mxu0 0
    %955 = vmatprep.subr.bf16.mxu0 0
    %956 = vmatpush2.bf16.msra.mxu0 0
    %957 = vmatprep.subr.bf16.mxu0 0
    %958 = vmatpush2.bf16.msra.mxu0 0
    %959 = vmatprep.mubr.bf16.mxu0 0
    %960 = vmatmul.mubr.bf16.gmra.mxu0 %v925
    %v961 = vpop.f32.mrf.mxu0
    %v962 = vadd.f32 0.0, %v961
    %v963 = vpop.f32.mrf.mxu0
    %v964 = vpop.f32.mrf.mxu0
    %v965 = vpop.f32.mrf.mxu0
    %966 = vdwg.mxu0
    %v967 = vadd.f32 %v811, %v962
    %969 = vrot.lane.b32.xlu0 %v813, 112
    %v970 = vpop.permute.xlu0 %969
    %971 = vrot.lane.b32.xlu0 %v814, 48
    %v972 = vpop.permute.xlu0 %971
    %v974 = vsel %vm167, %v970, 0
    %v977 = vsel %vm167, %v972, 0
    %979 = vmatprep.subr.bf16.mxu0 0
    %980 = vmatpush1.bf16.xpose.msra.mxu0 0
    %981 = vmatprep.subr.bf16.mxu0 0
    %982 = vmatpush1.bf16.xpose.msra.mxu0 0
    %983 = vmatprep.subr.bf16.mxu0 0
    %984 = vmatpush1.bf16.xpose.msra.mxu0 0
    %985 = vmatprep.subr.bf16.mxu0 0
    %986 = vmatpush1.bf16.xpose.msra.mxu0 0
    %987 = vmatprep.subr.bf16.mxu0 0
    %988 = vmatpush1.bf16.xpose.msra.mxu0 0
    %989 = vmatprep.subr.bf16.mxu0 0
    %990 = vmatpush1.bf16.xpose.msra.mxu0 0
    %991 = vmatprep.subr.bf16.mxu0 0
    %992 = vmatpush1.bf16.xpose.msra.mxu0 0
    %993 = vmatprep.subr.bf16.mxu0 0
    %994 = vmatpush1.bf16.xpose.msra.mxu0 %v977
    %995 = vmatprep.subr.bf16.mxu0 0
    %996 = vmatpush2.bf16.xpose.msra.mxu0 0
    %997 = vmatprep.subr.bf16.mxu0 0
    %998 = vmatpush2.bf16.xpose.msra.mxu0 0
    %999 = vmatprep.subr.bf16.mxu0 0
    %1000 = vmatpush2.bf16.xpose.msra.mxu0 0
    %1001 = vmatprep.subr.bf16.mxu0 0
    %1002 = vmatpush2.bf16.xpose.msra.mxu0 0
    %1003 = vmatprep.subr.bf16.mxu0 0
    %1004 = vmatpush2.bf16.xpose.msra.mxu0 0
    %1005 = vmatprep.subr.bf16.mxu0 0
    %1006 = vmatpush2.bf16.xpose.msra.mxu0 0
    %1007 = vmatprep.subr.bf16.mxu0 0
    %1008 = vmatpush2.bf16.xpose.msra.mxu0 0
    %1009 = vmatprep.subr.bf16.mxu0 0
    %1010 = vmatpush2.bf16.xpose.msra.mxu0 0
    %1011 = vmatprep.mubr.bf16.mxu0 0
    %1012 = vmatmul.mubr.bf16.gmra.mxu0 %v974
    %v1013 = vpop.f32.mrf.mxu0
    %v1014 = vadd.f32 0.0, %v1013
    %v1015 = vpop.f32.mrf.mxu0
    %v1016 = vpop.f32.mrf.mxu0
    %v1017 = vpop.f32.mrf.mxu0
    %1018 = vdwg.mxu0
    %v1019 = vsel %vm214, %v1014, -inf
    %1020 = vmax.xlane.f32.xlu0 %v1019
    %v1021 = vpop.xlane.xlu0 %1020
    %v1022 = vsub.f32 %v1014, %v1021
    %v1023 = vmul.f32 %v1022, 1.442695
    %v1024 = vpow.pop %v1023
    %v1025 = vsel %vm214, %v1024, 0.0
    %1026 = vadd.xlane.f32.xlu0 %v1025
    %v1027 = vpop.xlane.xlu0 %1026
    %v1028 = vrcp.pop %v1027
    %v1029 = vmul.f32 %v1024, %v1028
    %v1030 = vpack.c.bf16 %v1029, %v1029
    %1032 = vrot.lane.b32.xlu0 %v815, 112
    %v1033 = vpop.permute.xlu0 %1032
    %v1035 = vsel %vm214, %v1030, 0
    %v1038 = vsel %vm230, %v1033, 0
    %1040 = vmatprep.subr.bf16.mxu0 0
    %1041 = vmatpush1.bf16.msra.mxu0 0
    %1042 = vmatprep.subr.bf16.mxu0 0
    %1043 = vmatpush1.bf16.msra.mxu0 0
    %1044 = vmatprep.subr.bf16.mxu0 0
    %1045 = vmatpush1.bf16.msra.mxu0 0
    %1046 = vmatprep.subr.bf16.mxu0 0
    %1047 = vmatpush1.bf16.msra.mxu0 0
    %1048 = vmatprep.subr.bf16.mxu0 0
    %1049 = vmatpush1.bf16.msra.mxu0 0
    %1050 = vmatprep.subr.bf16.mxu0 0
    %1051 = vmatpush1.bf16.msra.mxu0 0
    %1052 = vmatprep.subr.bf16.mxu0 0
    %1053 = vmatpush1.bf16.msra.mxu0 0
    %1054 = vmatprep.subr.bf16.mxu0 0
    %1055 = vmatpush1.bf16.msra.mxu0 %v1038
    %1056 = vmatprep.subr.bf16.mxu0 0
    %1057 = vmatpush2.bf16.msra.mxu0 0
    %1058 = vmatprep.subr.bf16.mxu0 0
    %1059 = vmatpush2.bf16.msra.mxu0 0
    %1060 = vmatprep.subr.bf16.mxu0 0
    %1061 = vmatpush2.bf16.msra.mxu0 0
    %1062 = vmatprep.subr.bf16.mxu0 0
    %1063 = vmatpush2.bf16.msra.mxu0 0
    %1064 = vmatprep.subr.bf16.mxu0 0
    %1065 = vmatpush2.bf16.msra.mxu0 0
    %1066 = vmatprep.subr.bf16.mxu0 0
    %1067 = vmatpush2.bf16.msra.mxu0 0
    %1068 = vmatprep.subr.bf16.mxu0 0
    %1069 = vmatpush2.bf16.msra.mxu0 0
    %1070 = vmatprep.subr.bf16.mxu0 0
    %1071 = vmatpush2.bf16.msra.mxu0 0
    %1072 = vmatprep.mubr.bf16.mxu0 0
    %1073 = vmatmul.mubr.bf16.gmra.mxu0 %v1035
    %v1074 = vpop.f32.mrf.mxu0
    %v1075 = vadd.f32 0.0, %v1074
    %v1076 = vpop.f32.mrf.mxu0
    %v1077 = vpop.f32.mrf.mxu0
    %v1078 = vpop.f32.mrf.mxu0
    %1079 = vdwg.mxu0
    %v1080 = vpack.c.bf16 %v1075, %v1075
    %v1082 = vsel %vm167, %v1080, 0
    %1084 = vmatprep.subr.bf16.mxu0 0
    %1085 = vmatpush1.bf16.msra.mxu0 0
    %1086 = vmatprep.subr.bf16.mxu0 0
    %1087 = vmatpush1.bf16.msra.mxu0 0
    %1088 = vmatprep.subr.bf16.mxu0 0
    %1089 = vmatpush1.bf16.msra.mxu0 0
    %1090 = vmatprep.subr.bf16.mxu0 0
    %1091 = vmatpush1.bf16.msra.mxu0 0
    %1092 = vmatprep.subr.bf16.mxu0 0
    %1093 = vmatpush1.bf16.msra.mxu0 0
    %1094 = vmatprep.subr.bf16.mxu0 0
    %1095 = vmatpush1.bf16.msra.mxu0 0
    %1096 = vmatprep.subr.bf16.mxu0 0
    %1097 = vmatpush1.bf16.msra.mxu0 0
    %1098 = vmatprep.subr.bf16.mxu0 0
    %1099 = vmatpush1.bf16.msra.mxu0 %v442
    %1100 = vmatprep.subr.bf16.mxu0 0
    %1101 = vmatpush2.bf16.msra.mxu0 0
    %1102 = vmatprep.subr.bf16.mxu0 0
    %1103 = vmatpush2.bf16.msra.mxu0 0
    %1104 = vmatprep.subr.bf16.mxu0 0
    %1105 = vmatpush2.bf16.msra.mxu0 0
    %1106 = vmatprep.subr.bf16.mxu0 0
    %1107 = vmatpush2.bf16.msra.mxu0 0
    %1108 = vmatprep.subr.bf16.mxu0 0
    %1109 = vmatpush2.bf16.msra.mxu0 0
    %1110 = vmatprep.subr.bf16.mxu0 0
    %1111 = vmatpush2.bf16.msra.mxu0 0
    %1112 = vmatprep.subr.bf16.mxu0 0
    %1113 = vmatpush2.bf16.msra.mxu0 0
    %1114 = vmatprep.subr.bf16.mxu0 0
    %1115 = vmatpush2.bf16.msra.mxu0 0
    %1116 = vmatprep.mubr.bf16.mxu0 0
    %1117 = vmatmul.mubr.bf16.gmra.mxu0 %v1082
    %v1118 = vpop.f32.mrf.mxu0
    %v1119 = vadd.f32 0.0, %v1118
    %v1120 = vpop.f32.mrf.mxu0
    %v1121 = vpop.f32.mrf.mxu0
    %v1122 = vpop.f32.mrf.mxu0
    %1123 = vdwg.mxu0
    %v1124 = vadd.f32 %v967, %v1119
    %1125 = vrot.lane.b32.xlu0 %v813, 96
    %v1126 = vpop.permute.xlu0 %1125
    %1127 = vrot.lane.b32.xlu0 %v814, 32
    %v1128 = vpop.permute.xlu0 %1127
    %v1130 = vsel %vm167, %v1126, 0
    %v1133 = vsel %vm167, %v1128, 0
    %1135 = vmatprep.subr.bf16.mxu0 0
    %1136 = vmatpush1.bf16.xpose.msra.mxu0 0
    %1137 = vmatprep.subr.bf16.mxu0 0
    %1138 = vmatpush1.bf16.xpose.msra.mxu0 0
    %1139 = vmatprep.subr.bf16.mxu0 0
    %1140 = vmatpush1.bf16.xpose.msra.mxu0 0
    %1141 = vmatprep.subr.bf16.mxu0 0
    %1142 = vmatpush1.bf16.xpose.msra.mxu0 0
    %1143 = vmatprep.subr.bf16.mxu0 0
    %1144 = vmatpush1.bf16.xpose.msra.mxu0 0
    %1145 = vmatprep.subr.bf16.mxu0 0
    %1146 = vmatpush1.bf16.xpose.msra.mxu0 0
    %1147 = vmatprep.subr.bf16.mxu0 0
    %1148 = vmatpush1.bf16.xpose.msra.mxu0 0
    %1149 = vmatprep.subr.bf16.mxu0 0
    %1150 = vmatpush1.bf16.xpose.msra.mxu0 %v1133
    %1151 = vmatprep.subr.bf16.mxu0 0
    %1152 = vmatpush2.bf16.xpose.msra.mxu0 0
    %1153 = vmatprep.subr.bf16.mxu0 0
    %1154 = vmatpush2.bf16.xpose.msra.mxu0 0
    %1155 = vmatprep.subr.bf16.mxu0 0
    %1156 = vmatpush2.bf16.xpose.msra.mxu0 0
    %1157 = vmatprep.subr.bf16.mxu0 0
    %1158 = vmatpush2.bf16.xpose.msra.mxu0 0
    %1159 = vmatprep.subr.bf16.mxu0 0
    %1160 = vmatpush2.bf16.xpose.msra.mxu0 0
    %1161 = vmatprep.subr.bf16.mxu0 0
    %1162 = vmatpush2.bf16.xpose.msra.mxu0 0
    %1163 = vmatprep.subr.bf16.mxu0 0
    %1164 = vmatpush2.bf16.xpose.msra.mxu0 0
    %1165 = vmatprep.subr.bf16.mxu0 0
    %1166 = vmatpush2.bf16.xpose.msra.mxu0 0
    %1167 = vmatprep.mubr.bf16.mxu0 0
    %1168 = vmatmul.mubr.bf16.gmra.mxu0 %v1130
    %v1169 = vpop.f32.mrf.mxu0
    %v1170 = vadd.f32 0.0, %v1169
    %v1171 = vpop.f32.mrf.mxu0
    %v1172 = vpop.f32.mrf.mxu0
    %v1173 = vpop.f32.mrf.mxu0
    %1174 = vdwg.mxu0
    %v1175 = vsel %vm214, %v1170, -inf
    %1176 = vmax.xlane.f32.xlu0 %v1175
    %v1177 = vpop.xlane.xlu0 %1176
    %v1178 = vsub.f32 %v1170, %v1177
    %v1179 = vmul.f32 %v1178, 1.442695
    %v1180 = vpow.pop %v1179
    %v1181 = vsel %vm214, %v1180, 0.0
    %1182 = vadd.xlane.f32.xlu0 %v1181
    %v1183 = vpop.xlane.xlu0 %1182
    %v1184 = vrcp.pop %v1183
    %v1185 = vmul.f32 %v1180, %v1184
    %v1186 = vpack.c.bf16 %v1185, %v1185
    %1187 = vrot.lane.b32.xlu0 %v815, 96
    %v1188 = vpop.permute.xlu0 %1187
    %v1190 = vsel %vm214, %v1186, 0
    %v1193 = vsel %vm230, %v1188, 0
    %1195 = vmatprep.subr.bf16.mxu0 0
    %1196 = vmatpush1.bf16.msra.mxu0 0
    %1197 = vmatprep.subr.bf16.mxu0 0
    %1198 = vmatpush1.bf16.msra.mxu0 0
    %1199 = vmatprep.subr.bf16.mxu0 0
    %1200 = vmatpush1.bf16.msra.mxu0 0
    %1201 = vmatprep.subr.bf16.mxu0 0
    %1202 = vmatpush1.bf16.msra.mxu0 0
    %1203 = vmatprep.subr.bf16.mxu0 0
    %1204 = vmatpush1.bf16.msra.mxu0 0
    %1205 = vmatprep.subr.bf16.mxu0 0
    %1206 = vmatpush1.bf16.msra.mxu0 0
    %1207 = vmatprep.subr.bf16.mxu0 0
    %1208 = vmatpush1.bf16.msra.mxu0 0
    %1209 = vmatprep.subr.bf16.mxu0 0
    %1210 = vmatpush1.bf16.msra.mxu0 %v1193
    %1211 = vmatprep.subr.bf16.mxu0 0
    %1212 = vmatpush2.bf16.msra.mxu0 0
    %1213 = vmatprep.subr.bf16.mxu0 0
    %1214 = vmatpush2.bf16.msra.mxu0 0
    %1215 = vmatprep.subr.bf16.mxu0 0
    %1216 = vmatpush2.bf16.msra.mxu0 0
    %1217 = vmatprep.subr.bf16.mxu0 0
    %1218 = vmatpush2.bf16.msra.mxu0 0
    %1219 = vmatprep.subr.bf16.mxu0 0
    %1220 = vmatpush2.bf16.msra.mxu0 0
    %1221 = vmatprep.subr.bf16.mxu0 0
    %1222 = vmatpush2.bf16.msra.mxu0 0
    %1223 = vmatprep.subr.bf16.mxu0 0
    %1224 = vmatpush2.bf16.msra.mxu0 0
    %1225 = vmatprep.subr.bf16.mxu0 0
    %1226 = vmatpush2.bf16.msra.mxu0 0
    %1227 = vmatprep.mubr.bf16.mxu0 0
    %1228 = vmatmul.mubr.bf16.gmra.mxu0 %v1190
    %v1229 = vpop.f32.mrf.mxu0
    %v1230 = vadd.f32 0.0, %v1229
    %v1231 = vpop.f32.mrf.mxu0
    %v1232 = vpop.f32.mrf.mxu0
    %v1233 = vpop.f32.mrf.mxu0
    %1234 = vdwg.mxu0
    %v1235 = vpack.c.bf16 %v1230, %v1230
    %v1237 = vsel %vm167, %v1235, 0
    %1239 = vmatprep.subr.bf16.mxu0 0
    %1240 = vmatpush1.bf16.msra.mxu0 0
    %1241 = vmatprep.subr.bf16.mxu0 0
    %1242 = vmatpush1.bf16.msra.mxu0 0
    %1243 = vmatprep.subr.bf16.mxu0 0
    %1244 = vmatpush1.bf16.msra.mxu0 0
    %1245 = vmatprep.subr.bf16.mxu0 0
    %1246 = vmatpush1.bf16.msra.mxu0 0
    %1247 = vmatprep.subr.bf16.mxu0 0
    %1248 = vmatpush1.bf16.msra.mxu0 0
    %1249 = vmatprep.subr.bf16.mxu0 0
    %1250 = vmatpush1.bf16.msra.mxu0 0
    %1251 = vmatprep.subr.bf16.mxu0 0
    %1252 = vmatpush1.bf16.msra.mxu0 0
    %1253 = vmatprep.subr.bf16.mxu0 0
    %1254 = vmatpush1.bf16.msra.mxu0 %v603
    %1255 = vmatprep.subr.bf16.mxu0 0
    %1256 = vmatpush2.bf16.msra.mxu0 0
    %1257 = vmatprep.subr.bf16.mxu0 0
    %1258 = vmatpush2.bf16.msra.mxu0 0
    %1259 = vmatprep.subr.bf16.mxu0 0
    %1260 = vmatpush2.bf16.msra.mxu0 0
    %1261 = vmatprep.subr.bf16.mxu0 0
    %1262 = vmatpush2.bf16.msra.mxu0 0
    %1263 = vmatprep.subr.bf16.mxu0 0
    %1264 = vmatpush2.bf16.msra.mxu0 0
    %1265 = vmatprep.subr.bf16.mxu0 0
    %1266 = vmatpush2.bf16.msra.mxu0 0
    %1267 = vmatprep.subr.bf16.mxu0 0
    %1268 = vmatpush2.bf16.msra.mxu0 0
    %1269 = vmatprep.subr.bf16.mxu0 0
    %1270 = vmatpush2.bf16.msra.mxu0 0
    %1271 = vmatprep.mubr.bf16.mxu0 0
    %1272 = vmatmul.mubr.bf16.gmra.mxu0 %v1237
    %v1273 = vpop.f32.mrf.mxu0
    %v1274 = vadd.f32 0.0, %v1273
    %v1275 = vpop.f32.mrf.mxu0
    %v1276 = vpop.f32.mrf.mxu0
    %v1277 = vpop.f32.mrf.mxu0
    %1278 = vdwg.mxu0
    %v1279 = vadd.f32 %v1124, %v1274
    %1280 = vrot.lane.b32.xlu0 %v813, 80
    %v1281 = vpop.permute.xlu0 %1280
    %1282 = vrot.lane.b32.xlu0 %v814, 16
    %v1283 = vpop.permute.xlu0 %1282
    %v1285 = vsel %vm167, %v1281, 0
    %v1288 = vsel %vm167, %v1283, 0
    %1290 = vmatprep.subr.bf16.mxu0 0
    %1291 = vmatpush1.bf16.xpose.msra.mxu0 0
    %1292 = vmatprep.subr.bf16.mxu0 0
    %1293 = vmatpush1.bf16.xpose.msra.mxu0 0
    %1294 = vmatprep.subr.bf16.mxu0 0
    %1295 = vmatpush1.bf16.xpose.msra.mxu0 0
    %1296 = vmatprep.subr.bf16.mxu0 0
    %1297 = vmatpush1.bf16.xpose.msra.mxu0 0
    %1298 = vmatprep.subr.bf16.mxu0 0
    %1299 = vmatpush1.bf16.xpose.msra.mxu0 0
    %1300 = vmatprep.subr.bf16.mxu0 0
    %1301 = vmatpush1.bf16.xpose.msra.mxu0 0
    %1302 = vmatprep.subr.bf16.mxu0 0
    %1303 = vmatpush1.bf16.xpose.msra.mxu0 0
    %1304 = vmatprep.subr.bf16.mxu0 0
    %1305 = vmatpush1.bf16.xpose.msra.mxu0 %v1288
    %1306 = vmatprep.subr.bf16.mxu0 0
    %1307 = vmatpush2.bf16.xpose.msra.mxu0 0
    %1308 = vmatprep.subr.bf16.mxu0 0
    %1309 = vmatpush2.bf16.xpose.msra.mxu0 0
    %1310 = vmatprep.subr.bf16.mxu0 0
    %1311 = vmatpush2.bf16.xpose.msra.mxu0 0
    %1312 = vmatprep.subr.bf16.mxu0 0
    %1313 = vmatpush2.bf16.xpose.msra.mxu0 0
    %1314 = vmatprep.subr.bf16.mxu0 0
    %1315 = vmatpush2.bf16.xpose.msra.mxu0 0
    %1316 = vmatprep.subr.bf16.mxu0 0
    %1317 = vmatpush2.bf16.xpose.msra.mxu0 0
    %1318 = vmatprep.subr.bf16.mxu0 0
    %1319 = vmatpush2.bf16.xpose.msra.mxu0 0
    %1320 = vmatprep.subr.bf16.mxu0 0
    %1321 = vmatpush2.bf16.xpose.msra.mxu0 0
    %1322 = vmatprep.mubr.bf16.mxu0 0
    %1323 = vmatmul.mubr.bf16.gmra.mxu0 %v1285
    %v1324 = vpop.f32.mrf.mxu0
    %v1325 = vadd.f32 0.0, %v1324
    %v1326 = vpop.f32.mrf.mxu0
    %v1327 = vpop.f32.mrf.mxu0
    %v1328 = vpop.f32.mrf.mxu0
    %1329 = vdwg.mxu0
    %v1330 = vsel %vm214, %v1325, -inf
    %1331 = vmax.xlane.f32.xlu0 %v1330
    %v1332 = vpop.xlane.xlu0 %1331
    %v1333 = vsub.f32 %v1325, %v1332
    %v1334 = vmul.f32 %v1333, 1.442695
    %v1335 = vpow.pop %v1334
    %v1336 = vsel %vm214, %v1335, 0.0
    %1337 = vadd.xlane.f32.xlu0 %v1336
    %v1338 = vpop.xlane.xlu0 %1337
    %v1339 = vrcp.pop %v1338
    %v1340 = vmul.f32 %v1335, %v1339
    %v1341 = vpack.c.bf16 %v1340, %v1340
    %1342 = vrot.lane.b32.xlu0 %v815, 80
    %v1343 = vpop.permute.xlu0 %1342
    %v1345 = vsel %vm214, %v1341, 0
    %v1348 = vsel %vm230, %v1343, 0
    %1350 = vmatprep.subr.bf16.mxu0 0
    %1351 = vmatpush1.bf16.msra.mxu0 0
    %1352 = vmatprep.subr.bf16.mxu0 0
    %1353 = vmatpush1.bf16.msra.mxu0 0
    %1354 = vmatprep.subr.bf16.mxu0 0
    %1355 = vmatpush1.bf16.msra.mxu0 0
    %1356 = vmatprep.subr.bf16.mxu0 0
    %1357 = vmatpush1.bf16.msra.mxu0 0
    %1358 = vmatprep.subr.bf16.mxu0 0
    %1359 = vmatpush1.bf16.msra.mxu0 0
    %1360 = vmatprep.subr.bf16.mxu0 0
    %1361 = vmatpush1.bf16.msra.mxu0 0
    %1362 = vmatprep.subr.bf16.mxu0 0
    %1363 = vmatpush1.bf16.msra.mxu0 0
    %1364 = vmatprep.subr.bf16.mxu0 0
    %1365 = vmatpush1.bf16.msra.mxu0 %v1348
    %1366 = vmatprep.subr.bf16.mxu0 0
    %1367 = vmatpush2.bf16.msra.mxu0 0
    %1368 = vmatprep.subr.bf16.mxu0 0
    %1369 = vmatpush2.bf16.msra.mxu0 0
    %1370 = vmatprep.subr.bf16.mxu0 0
    %1371 = vmatpush2.bf16.msra.mxu0 0
    %1372 = vmatprep.subr.bf16.mxu0 0
    %1373 = vmatpush2.bf16.msra.mxu0 0
    %1374 = vmatprep.subr.bf16.mxu0 0
    %1375 = vmatpush2.bf16.msra.mxu0 0
    %1376 = vmatprep.subr.bf16.mxu0 0
    %1377 = vmatpush2.bf16.msra.mxu0 0
    %1378 = vmatprep.subr.bf16.mxu0 0
    %1379 = vmatpush2.bf16.msra.mxu0 0
    %1380 = vmatprep.subr.bf16.mxu0 0
    %1381 = vmatpush2.bf16.msra.mxu0 0
    %1382 = vmatprep.mubr.bf16.mxu0 0
    %1383 = vmatmul.mubr.bf16.gmra.mxu0 %v1345
    %v1384 = vpop.f32.mrf.mxu0
    %v1385 = vadd.f32 0.0, %v1384
    %v1386 = vpop.f32.mrf.mxu0
    %v1387 = vpop.f32.mrf.mxu0
    %v1388 = vpop.f32.mrf.mxu0
    %1389 = vdwg.mxu0
    %v1390 = vpack.c.bf16 %v1385, %v1385
    %v1392 = vsel %vm167, %v1390, 0
    %1394 = vmatprep.subr.bf16.mxu0 0
    %1395 = vmatpush1.bf16.msra.mxu0 0
    %1396 = vmatprep.subr.bf16.mxu0 0
    %1397 = vmatpush1.bf16.msra.mxu0 0
    %1398 = vmatprep.subr.bf16.mxu0 0
    %1399 = vmatpush1.bf16.msra.mxu0 0
    %1400 = vmatprep.subr.bf16.mxu0 0
    %1401 = vmatpush1.bf16.msra.mxu0 0
    %1402 = vmatprep.subr.bf16.mxu0 0
    %1403 = vmatpush1.bf16.msra.mxu0 0
    %1404 = vmatprep.subr.bf16.mxu0 0
    %1405 = vmatpush1.bf16.msra.mxu0 0
    %1406 = vmatprep.subr.bf16.mxu0 0
    %1407 = vmatpush1.bf16.msra.mxu0 0
    %1408 = vmatprep.subr.bf16.mxu0 0
    %1409 = vmatpush1.bf16.msra.mxu0 %v764
    %1410 = vmatprep.subr.bf16.mxu0 0
    %1411 = vmatpush2.bf16.msra.mxu0 0
    %1412 = vmatprep.subr.bf16.mxu0 0
    %1413 = vmatpush2.bf16.msra.mxu0 0
    %1414 = vmatprep.subr.bf16.mxu0 0
    %1415 = vmatpush2.bf16.msra.mxu0 0
    %1416 = vmatprep.subr.bf16.mxu0 0
    %1417 = vmatpush2.bf16.msra.mxu0 0
    %1418 = vmatprep.subr.bf16.mxu0 0
    %1419 = vmatpush2.bf16.msra.mxu0 0
    %1420 = vmatprep.subr.bf16.mxu0 0
    %1421 = vmatpush2.bf16.msra.mxu0 0
    %1422 = vmatprep.subr.bf16.mxu0 0
    %1423 = vmatpush2.bf16.msra.mxu0 0
    %1424 = vmatprep.subr.bf16.mxu0 0
    %1425 = vmatpush2.bf16.msra.mxu0 0
    %1426 = vmatprep.mubr.bf16.mxu0 0
    %1427 = vmatmul.mubr.bf16.gmra.mxu0 %v1392
    %v1428 = vpop.f32.mrf.mxu0
    %v1429 = vadd.f32 0.0, %v1428
    %v1430 = vpop.f32.mrf.mxu0
    %v1431 = vpop.f32.mrf.mxu0
    %v1432 = vpop.f32.mrf.mxu0
    %1433 = vdwg.mxu0
    %v1434 = vadd.f32 %v1279, %v1429
    %s1435 = scalar_lea.vmem [#allocation2], 8
    %1436 = vst.msk [vmem:[%s1435] sm:$0xff] %vm29, %v1434
    // Predicated region
    $region26: #{tpu_custom_call.1} parent=1 // pred_check
      _
    $region27: #{tpu_custom_call.1} parent=1 // pred_check_branch
      %1438 = sbr.rel (0) target = $region29
    $region28: #{tpu_custom_call.1} parent=1 // pred_region
      %s1440 = ssub.s32 256, 256
      %1441 = vsyncadd [#allocation3], %s1440
      %s1442 = sshll.u32 [#allocation2], 4
      %s1443 = int_to_ptr.vmem [resolvable:$true] %s1442
      %1448 = dma.vmem_to_hbm [thread:$0]  %s1443, 256, %s6, [#allocation3], 128, 128, 8
    $region29: #{tpu_custom_call.1} parent=1 // pred_fallthru
      _
    // Predicated region
    $region30: #{tpu_custom_call.1} parent=1 // pred_check
      _
    $region31: #{tpu_custom_call.1} parent=1 // pred_check_branch
      %1450 = sbr.rel (0) target = $region33
    $region32: #{tpu_custom_call.1} parent=1 // pred_region
      %1451 = dma.done [#allocation3], 256
    $region33: #{tpu_custom_call.1} parent=1 // pred_fallthru
      _
    %1452 = vsyncpa [#allocation3], 1

</llo_original>
